<compile_context>
chip_gen: v5e
topology: v5e:2x2
jax: 0.10.0
libtpu: 0.0.40
codegen_flags: <defaults>
</compile_context>

<pallas_src>
import functools

import jax
import jax.numpy as jnp
from jax import lax
from jax.experimental import pallas as pl
from jax.experimental.pallas import tpu as pltpu

_UNROLL_T = 16   # fully unroll the recurrence up to this many timesteps


def gru_mlp_kernel(x_ref,
                   wih0_ref, whh0_ref, bi0_ref, bh0_ref,
                   w1_ref, b1_ref,
                   wfc1_ref, bfc1_ref, wfc2_ref, bfc2_ref,
                   out_ref, *scratch, seq_len, batch, hidden, unroll_limit):
    T, B, H = seq_len, batch, hidden

    def mm(a, w):
        # MXU matmul; operand dtype follows the (possibly bf16) weights,
        # accumulation is always f32 (gate math stays f32 -> v5e-safe).
        return jnp.dot(a.astype(w.dtype), w, preferred_element_type=jnp.float32)

    # ---- batched layer-0 input projection: ONE (T*B, D) @ (D, 3H) MXU pass.
    # bi0 = [b_ir+b_hr, b_iz+b_hz, b_in] already folded in.
    gi0 = mm(x_ref[...], wih0_ref[...]) + bi0_ref[...]        # (T*B, 3H) f32

    bh0 = bh0_ref[...]     # (1, 3H)  [0, 0, b_hn_l0]
    b1 = b1_ref[...]       # (1, 4H)  [bir+bhr, biz+bhz, bin, bhn]  (layer 1)

    def step(h0, h1, gi):
        # ---- layer 0: ONE (H, 3H) hidden matmul; static lane slices per gate.
        gh = mm(h0, whh0_ref[...]) + bh0                      # (B, 3H)
        r0 = jax.nn.sigmoid(gi[:, :H] + gh[:, :H])
        z0 = jax.nn.sigmoid(gi[:, H:2 * H] + gh[:, H:2 * H])
        n0 = jnp.tanh(gi[:, 2 * H:] + r0 * gh[:, 2 * H:])     # b_hn already in gh
        h0 = (1.0 - z0) * n0 + z0 * h0
        # ---- layer 1: input + hidden fused into ONE (2H, 4H) matmul on [h0|h1].
        # Lane groups of g1: [r_sum | z_sum | gi_n | gh_n(+b_hn)].
        g1 = mm(jnp.concatenate([h0, h1], axis=-1), w1_ref[...]) + b1
        r1 = jax.nn.sigmoid(g1[:, :H])
        z1 = jax.nn.sigmoid(g1[:, H:2 * H])
        n1 = jnp.tanh(g1[:, 2 * H:3 * H] + r1 * g1[:, 3 * H:])
        h1 = (1.0 - z1) * n1 + z1 * h1
        return h0, h1

    h0 = jnp.zeros((B, H), jnp.float32)
    h1 = jnp.zeros((B, H), jnp.float32)

    if T <= unroll_limit:
        # Fully unrolled interleaved 2-layer recurrence (T is compile-time):
        # layer-1 step t only needs h0[t] and h1[t-1], so the two recurrent
        # chains overlap after unrolling.
        for t in range(T):
            h0, h1 = step(h0, h1, gi0[t * B:(t + 1) * B])
    else:
        # Larger T: bounded-unroll fori_loop over a VMEM scratch holding the
        # pre-projection, so live ranges stay capped.
        gi_scr = scratch[0]
        gi_scr[...] = gi0.reshape(T, B, 3 * H)

        def body(t, carry):
            h0_c, h1_c = carry
            return step(h0_c, h1_c, gi_scr[t])

        h0, h1 = lax.fori_loop(0, T, body, (h0, h1), unroll=2)

    # ---- FC head: relu(fc1) -> fc2 (output lane-padded to 128 for a full vst).
    hid = jnp.maximum(mm(h1, wfc1_ref[...]) + bfc1_ref[...], 0.0)
    out_ref[...] = mm(hid, wfc2_ref[...]) + bfc2_ref[...]


def prepare_params(params, compute_dtype=jnp.float32):
    """One-time parameter prep (fuse / transpose / pad / cast) — hoisted out of
    the per-call forward path.  compute_dtype controls MXU operand dtype
    (bf16 is a single MXU pass on all generations incl. v5e); biases and all
    gate math stay f32."""
    H = params["w_hh_l0"].shape[1]
    F = params["fc1_w"].shape[0]
    O = params["fc2_w"].shape[0]
    O_pad = max(128, ((O + 127) // 128) * 128)
    cd = compute_dtype

    # Layer 0: lane-dense fused slabs (D, 3H) / (H, 3H), column groups [r|z|n].
    wih0 = params["w_ih_l0"].T.astype(cd)
    whh0 = params["w_hh_l0"].T.astype(cd)
    bih0, bhh0 = params["b_ih_l0"], params["b_hh_l0"]
    bi0 = jnp.concatenate([bih0[:2 * H] + bhh0[:2 * H], bih0[2 * H:]]
                          ).reshape(1, 3 * H).astype(jnp.float32)
    bh0 = jnp.concatenate([jnp.zeros((2 * H,), jnp.float32), bhh0[2 * H:]]
                          ).reshape(1, 3 * H).astype(jnp.float32)

    # Layer 1: input+hidden fused (2H, 4H) weight for the [h0 | h1] operand.
    # Column groups: [r_sum | z_sum | gi_n | gh_n]; the n-gate's hidden
    # contribution stays in its own lane group (it must remain inside r*(...)).
    wih1 = params["w_ih_l1"].T   # (H, 3H)
    whh1 = params["w_hh_l1"].T   # (H, 3H)
    zHH = jnp.zeros((H, H), jnp.float32)
    w1 = jnp.concatenate([
        jnp.concatenate([wih1, zHH], axis=1),                            # [r|z|n|0]
        jnp.concatenate([whh1[:, :2 * H], zHH, whh1[:, 2 * H:]], axis=1)  # [r|z|0|n]
    ], axis=0).astype(cd)                                                # (2H, 4H)
    bih1, bhh1 = params["b_ih_l1"], params["b_hh_l1"]
    b1 = jnp.concatenate([bih1[:2 * H] + bhh1[:2 * H], bih1[2 * H:], bhh1[2 * H:]]
                         ).reshape(1, 4 * H).astype(jnp.float32)

    # FC head; fc2 lane-padded to 128 for an unmasked output store.
    wfc1 = params["fc1_w"].T.astype(cd)
    bfc1 = params["fc1_b"].reshape(1, -1).astype(jnp.float32)
    wfc2 = jnp.zeros((F, O_pad), cd).at[:, :O].set(params["fc2_w"].T.astype(cd))
    bfc2 = jnp.zeros((1, O_pad), jnp.float32).at[:, :O].set(
        params["fc2_b"].reshape(1, -1).astype(jnp.float32))

    return (wih0, whh0, bi0, bh0, w1, b1, wfc1, bfc1, wfc2, bfc2)


@functools.partial(jax.jit, static_argnums=(2,))
def gru_model_forward(x, prepared, output_dim):
    """x: (B, T, D) batch-first, like the PyTorch module."""
    B, T, D = x.shape
    H = prepared[1].shape[0]          # whh0 is (H, 3H)
    O_pad = prepared[-1].shape[-1]
    cd = prepared[0].dtype

    # Time-major, flattened to (T*B, D) so the layer-0 input projection is one
    # batched matmul inside the kernel.
    x_flat = jnp.transpose(x, (1, 0, 2)).reshape(T * B, D).astype(cd)

    scratch = ([] if T <= _UNROLL_T
               else [pltpu.VMEM((T, B, 3 * H), jnp.float32)])

    kernel = functools.partial(gru_mlp_kernel, seq_len=T, batch=B, hidden=H,
                               unroll_limit=_UNROLL_T)

    # No grid: total footprint is a few hundred KiB of VMEM, single TC.
    # At production batch sizes, add a batch grid axis (B tiles, multiple of 8)
    # with dimension_semantics=("parallel",) so v7x's two TensorCores split B,
    # and chunk the (T*B, 3H) pre-projection over T against v7x's 64 MiB VMEM.
    out = pl.pallas_call(
        kernel,
        out_shape=jax.ShapeDtypeStruct((B, O_pad), jnp.float32),
        in_specs=[pl.BlockSpec(memory_space=pltpu.MemorySpace.VMEM)]
                 * (1 + len(prepared)),
        out_specs=pl.BlockSpec(memory_space=pltpu.MemorySpace.VMEM),
        scratch_shapes=scratch,
    )(x_flat, *prepared)
    return out[:, :output_dim]


# ---------------- pure-JAX reference (mirrors torch.nn.GRU) ----------------
def _ref_gru_cell(x_t, h, wih, whh, bih, bhh, H):
    gi = x_t @ wih.T + bih
    gh = h @ whh.T + bhh
    r = jax.nn.sigmoid(gi[:, :H] + gh[:, :H])
    z = jax.nn.sigmoid(gi[:, H:2 * H] + gh[:, H:2 * H])
    n = jnp.tanh(gi[:, 2 * H:] + r * gh[:, 2 * H:])
    return (1.0 - z) * n + z * h


def reference_forward(x, p):
    B, T, D = x.shape
    H = p["w_hh_l0"].shape[1]
    h = jnp.zeros((B, H), jnp.float32)
    outs = []
    for t in range(T):
        h = _ref_gru_cell(x[:, t, :], h, p["w_ih_l0"], p["w_hh_l0"],
                          p["b_ih_l0"], p["b_hh_l0"], H)
        outs.append(h)
    seq = jnp.stack(outs, axis=1)
    h = jnp.zeros((B, H), jnp.float32)
    for t in range(T):
        h = _ref_gru_cell(seq[:, t, :], h, p["w_ih_l1"], p["w_hh_l1"],
                          p["b_ih_l1"], p["b_hh_l1"], H)
    hid = jnp.maximum(h @ p["fc1_w"].T + p["fc1_b"], 0.0)
    return hid @ p["fc2_w"].T + p["fc2_b"]


def init_params(key, input_dim, hidden_dim, fc_hidden_dim, output_dim):
    ks = jax.random.split(key, 12)
    H3 = 3 * hidden_dim
    s = 0.1
    return {
        "w_ih_l0": s * jax.random.normal(ks[0], (H3, input_dim), jnp.float32),
        "w_hh_l0": s * jax.random.normal(ks[1], (H3, hidden_dim), jnp.float32),
        "b_ih_l0": s * jax.random.normal(ks[2], (H3,), jnp.float32),
        "b_hh_l0": s * jax.random.normal(ks[3], (H3,), jnp.float32),
        "w_ih_l1": s * jax.random.normal(ks[4], (H3, hidden_dim), jnp.float32),
        "w_hh_l1": s * jax.random.normal(ks[5], (H3, hidden_dim), jnp.float32),
        "b_ih_l1": s * jax.random.normal(ks[6], (H3,), jnp.float32),
        "b_hh_l1": s * jax.random.normal(ks[7], (H3,), jnp.float32),
        "fc1_w": s * jax.random.normal(ks[8], (fc_hidden_dim, hidden_dim), jnp.float32),
        "fc1_b": s * jax.random.normal(ks[9], (fc_hidden_dim,), jnp.float32),
        "fc2_w": s * jax.random.normal(ks[10], (output_dim, fc_hidden_dim), jnp.float32),
        "fc2_b": s * jax.random.normal(ks[11], (output_dim,), jnp.float32),
    }


if __name__ == "__main__":
    B, T, D = 8, 8, 16          # batch, seq_len, input_dim
    H, F, O = 32, 64, 1         # hidden_dim, fc_hidden_dim, output_dim

    key = jax.random.PRNGKey(0)
    kx, kp, kx2 = jax.random.split(key, 3)
    x = jax.random.normal(kx, (B, T, D), jnp.float32)
    params = init_params(kp, D, H, F, O)

    ref = jax.block_until_ready(reference_forward(x, params))

    # f32 MXU operands: strict match with the reference (unrolled path).
    prep_f32 = prepare_params(params, jnp.float32)
    out = jax.block_until_ready(gru_model_forward(x, prep_f32, O))
    assert out.shape == (B, O), out.shape
    err = float(jnp.max(jnp.abs(out - ref)))
    assert jnp.allclose(out, ref, atol=1e-4, rtol=1e-4), f"f32 max abs err {err}"

    # bf16 MXU operands (fast path on all generations incl. v5e); f32 gate
    # math / accumulation; looser tolerance since bf16 error compounds over T.
    prep_bf16 = prepare_params(params, jnp.bfloat16)
    out_bf16 = jax.block_until_ready(gru_model_forward(x, prep_bf16, O))
    err16 = float(jnp.max(jnp.abs(out_bf16 - ref)))
    assert jnp.allclose(out_bf16, ref, atol=5e-2, rtol=5e-2), \
        f"bf16 max abs err {err16}"

    # Longer sequence exercising the lax.fori_loop(unroll=2) path.
    T2 = 24
    x2 = jax.random.normal(kx2, (B, T2, D), jnp.float32)
    ref2 = jax.block_until_ready(reference_forward(x2, params))
    out2 = jax.block_until_ready(gru_model_forward(x2, prep_f32, O))
    err2 = float(jnp.max(jnp.abs(out2 - ref2)))
    assert jnp.allclose(out2, ref2, atol=1e-4, rtol=1e-4), \
        f"fori-path max abs err {err2}"

    print("KERNEL_OK")
</pallas_src>

<mosaic_0001>
module attributes {stable_mosaic.version = 11 : i64} {
  func.func @gru_mlp_kernel(%arg0: memref<64x16xf32, #tpu.memory_space<vmem>>, %arg1: memref<16x96xf32, #tpu.memory_space<vmem>>, %arg2: memref<32x96xf32, #tpu.memory_space<vmem>>, %arg3: memref<1x96xf32, #tpu.memory_space<vmem>>, %arg4: memref<1x96xf32, #tpu.memory_space<vmem>>, %arg5: memref<64x128xf32, #tpu.memory_space<vmem>>, %arg6: memref<1x128xf32, #tpu.memory_space<vmem>>, %arg7: memref<32x64xf32, #tpu.memory_space<vmem>>, %arg8: memref<1x64xf32, #tpu.memory_space<vmem>>, %arg9: memref<64x128xf32, #tpu.memory_space<vmem>>, %arg10: memref<1x128xf32, #tpu.memory_space<vmem>>, %arg11: memref<8x128xf32, #tpu.memory_space<vmem>>) attributes {dimension_semantics = [], scalar_prefetch = 0 : i64, scratch_operands = 0 : i64, tpu.core_type = #tpu.core_type<tc>} {
    %c0 = arith.constant 0 : index
    %c0_0 = arith.constant 0 : index
    %0 = vector.load %arg0[%c0, %c0_0] : memref<64x16xf32, #tpu.memory_space<vmem>>, vector<64x16xf32>
    %c0_1 = arith.constant 0 : index
    %c0_2 = arith.constant 0 : index
    %1 = vector.load %arg1[%c0_1, %c0_2] : memref<16x96xf32, #tpu.memory_space<vmem>>, vector<16x96xf32>
    %cst = arith.constant dense<0.000000e+00> : vector<64x96xf32>
    %2 = tpu.matmul %0, %1, %cst {dimension_numbers = #tpu.dot_dimension_numbers<[1], [0], [0], [1], [0, 0, 1, 1], [], []>} : vector<64x16xf32>, vector<16x96xf32>, vector<64x96xf32> -> vector<64x96xf32>
    %c0_3 = arith.constant 0 : index
    %c0_4 = arith.constant 0 : index
    %3 = vector.load %arg3[%c0_3, %c0_4] : memref<1x96xf32, #tpu.memory_space<vmem>>, vector<1x96xf32>
    %4 = vector.broadcast %3 : vector<1x96xf32> to vector<64x96xf32>
    %5 = arith.addf %2, %4 : vector<64x96xf32>
    %c0_5 = arith.constant 0 : index
    %c0_6 = arith.constant 0 : index
    %6 = vector.load %arg4[%c0_5, %c0_6] : memref<1x96xf32, #tpu.memory_space<vmem>>, vector<1x96xf32>
    %c0_7 = arith.constant 0 : index
    %c0_8 = arith.constant 0 : index
    %7 = vector.load %arg6[%c0_7, %c0_8] : memref<1x128xf32, #tpu.memory_space<vmem>>, vector<1x128xf32>
    %cst_9 = arith.constant 0.000000e+00 : f32
    %8 = vector.broadcast %cst_9 : f32 to vector<8x32xf32>
    %cst_10 = arith.constant 0.000000e+00 : f32
    %9 = vector.broadcast %cst_10 : f32 to vector<8x32xf32>
    %10 = vector.extract_strided_slice %5 {offsets = [0, 0], sizes = [8, 96], strides = [1, 1]} : vector<64x96xf32> to vector<8x96xf32>
    %c0_11 = arith.constant 0 : index
    %c0_12 = arith.constant 0 : index
    %11 = vector.load %arg2[%c0_11, %c0_12] : memref<32x96xf32, #tpu.memory_space<vmem>>, vector<32x96xf32>
    %cst_13 = arith.constant dense<0.000000e+00> : vector<8x96xf32>
    %12 = tpu.matmul %8, %11, %cst_13 {dimension_numbers = #tpu.dot_dimension_numbers<[1], [0], [0], [1], [0, 0, 1, 1], [], []>} : vector<8x32xf32>, vector<32x96xf32>, vector<8x96xf32> -> vector<8x96xf32>
    %13 = vector.broadcast %6 : vector<1x96xf32> to vector<8x96xf32>
    %14 = arith.addf %12, %13 : vector<8x96xf32>
    %15 = vector.extract_strided_slice %10 {offsets = [0, 0], sizes = [8, 32], strides = [1, 1]} : vector<8x96xf32> to vector<8x32xf32>
    %16 = vector.extract_strided_slice %14 {offsets = [0, 0], sizes = [8, 32], strides = [1, 1]} : vector<8x96xf32> to vector<8x32xf32>
    %17 = arith.addf %15, %16 : vector<8x32xf32>
    %18 = arith.negf %17 : vector<8x32xf32>
    %19 = math.exp %18 : vector<8x32xf32>
    %cst_14 = arith.constant 1.000000e+00 : f32
    %20 = vector.broadcast %cst_14 : f32 to vector<8x32xf32>
    %21 = arith.addf %20, %19 : vector<8x32xf32>
    %22 = arith.divf %20, %21 : vector<8x32xf32>
    %23 = vector.extract_strided_slice %10 {offsets = [0, 32], sizes = [8, 32], strides = [1, 1]} : vector<8x96xf32> to vector<8x32xf32>
    %24 = vector.extract_strided_slice %14 {offsets = [0, 32], sizes = [8, 32], strides = [1, 1]} : vector<8x96xf32> to vector<8x32xf32>
    %25 = arith.addf %23, %24 : vector<8x32xf32>
    %26 = arith.negf %25 : vector<8x32xf32>
    %27 = math.exp %26 : vector<8x32xf32>
    %cst_15 = arith.constant 1.000000e+00 : f32
    %28 = vector.broadcast %cst_15 : f32 to vector<8x32xf32>
    %29 = arith.addf %28, %27 : vector<8x32xf32>
    %30 = arith.divf %28, %29 : vector<8x32xf32>
    %31 = vector.extract_strided_slice %10 {offsets = [0, 64], sizes = [8, 32], strides = [1, 1]} : vector<8x96xf32> to vector<8x32xf32>
    %32 = vector.extract_strided_slice %14 {offsets = [0, 64], sizes = [8, 32], strides = [1, 1]} : vector<8x96xf32> to vector<8x32xf32>
    %33 = arith.mulf %22, %32 : vector<8x32xf32>
    %34 = arith.addf %31, %33 : vector<8x32xf32>
    %35 = math.tanh %34 : vector<8x32xf32>
    %cst_16 = arith.constant 1.000000e+00 : f32
    %36 = vector.broadcast %cst_16 : f32 to vector<8x32xf32>
    %37 = arith.subf %36, %30 : vector<8x32xf32>
    %38 = arith.mulf %37, %35 : vector<8x32xf32>
    %39 = arith.mulf %30, %8 : vector<8x32xf32>
    %40 = arith.addf %38, %39 : vector<8x32xf32>
    %41 = tpu.concatenate %40, %9 in 1 : vector<8x32xf32>, vector<8x32xf32> -> vector<8x64xf32>
    %c0_17 = arith.constant 0 : index
    %c0_18 = arith.constant 0 : index
    %42 = vector.load %arg5[%c0_17, %c0_18] : memref<64x128xf32, #tpu.memory_space<vmem>>, vector<64x128xf32>
    %cst_19 = arith.constant dense<0.000000e+00> : vector<8x128xf32>
    %43 = tpu.matmul %41, %42, %cst_19 {dimension_numbers = #tpu.dot_dimension_numbers<[1], [0], [0], [1], [0, 0, 1, 1], [], []>} : vector<8x64xf32>, vector<64x128xf32>, vector<8x128xf32> -> vector<8x128xf32>
    %44 = vector.broadcast %7 : vector<1x128xf32> to vector<8x128xf32>
    %45 = arith.addf %43, %44 : vector<8x128xf32>
    %46 = vector.extract_strided_slice %45 {offsets = [0, 0], sizes = [8, 32], strides = [1, 1]} : vector<8x128xf32> to vector<8x32xf32>
    %47 = arith.negf %46 : vector<8x32xf32>
    %48 = math.exp %47 : vector<8x32xf32>
    %cst_20 = arith.constant 1.000000e+00 : f32
    %49 = vector.broadcast %cst_20 : f32 to vector<8x32xf32>
    %50 = arith.addf %49, %48 : vector<8x32xf32>
    %51 = arith.divf %49, %50 : vector<8x32xf32>
    %52 = vector.extract_strided_slice %45 {offsets = [0, 32], sizes = [8, 32], strides = [1, 1]} : vector<8x128xf32> to vector<8x32xf32>
    %53 = arith.negf %52 : vector<8x32xf32>
    %54 = math.exp %53 : vector<8x32xf32>
    %cst_21 = arith.constant 1.000000e+00 : f32
    %55 = vector.broadcast %cst_21 : f32 to vector<8x32xf32>
    %56 = arith.addf %55, %54 : vector<8x32xf32>
    %57 = arith.divf %55, %56 : vector<8x32xf32>
    %58 = vector.extract_strided_slice %45 {offsets = [0, 64], sizes = [8, 32], strides = [1, 1]} : vector<8x128xf32> to vector<8x32xf32>
    %59 = vector.extract_strided_slice %45 {offsets = [0, 96], sizes = [8, 32], strides = [1, 1]} : vector<8x128xf32> to vector<8x32xf32>
    %60 = arith.mulf %51, %59 : vector<8x32xf32>
    %61 = arith.addf %58, %60 : vector<8x32xf32>
    %62 = math.tanh %61 : vector<8x32xf32>
    %cst_22 = arith.constant 1.000000e+00 : f32
    %63 = vector.broadcast %cst_22 : f32 to vector<8x32xf32>
    %64 = arith.subf %63, %57 : vector<8x32xf32>
    %65 = arith.mulf %64, %62 : vector<8x32xf32>
    %66 = arith.mulf %57, %9 : vector<8x32xf32>
    %67 = arith.addf %65, %66 : vector<8x32xf32>
    %68 = vector.extract_strided_slice %5 {offsets = [8, 0], sizes = [8, 96], strides = [1, 1]} : vector<64x96xf32> to vector<8x96xf32>
    %c0_23 = arith.constant 0 : index
    %c0_24 = arith.constant 0 : index
    %69 = vector.load %arg2[%c0_23, %c0_24] : memref<32x96xf32, #tpu.memory_space<vmem>>, vector<32x96xf32>
    %cst_25 = arith.constant dense<0.000000e+00> : vector<8x96xf32>
    %70 = tpu.matmul %40, %69, %cst_25 {dimension_numbers = #tpu.dot_dimension_numbers<[1], [0], [0], [1], [0, 0, 1, 1], [], []>} : vector<8x32xf32>, vector<32x96xf32>, vector<8x96xf32> -> vector<8x96xf32>
    %71 = vector.broadcast %6 : vector<1x96xf32> to vector<8x96xf32>
    %72 = arith.addf %70, %71 : vector<8x96xf32>
    %73 = vector.extract_strided_slice %68 {offsets = [0, 0], sizes = [8, 32], strides = [1, 1]} : vector<8x96xf32> to vector<8x32xf32>
    %74 = vector.extract_strided_slice %72 {offsets = [0, 0], sizes = [8, 32], strides = [1, 1]} : vector<8x96xf32> to vector<8x32xf32>
    %75 = arith.addf %73, %74 : vector<8x32xf32>
    %76 = arith.negf %75 : vector<8x32xf32>
    %77 = math.exp %76 : vector<8x32xf32>
    %cst_26 = arith.constant 1.000000e+00 : f32
    %78 = vector.broadcast %cst_26 : f32 to vector<8x32xf32>
    %79 = arith.addf %78, %77 : vector<8x32xf32>
    %80 = arith.divf %78, %79 : vector<8x32xf32>
    %81 = vector.extract_strided_slice %68 {offsets = [0, 32], sizes = [8, 32], strides = [1, 1]} : vector<8x96xf32> to vector<8x32xf32>
    %82 = vector.extract_strided_slice %72 {offsets = [0, 32], sizes = [8, 32], strides = [1, 1]} : vector<8x96xf32> to vector<8x32xf32>
    %83 = arith.addf %81, %82 : vector<8x32xf32>
    %84 = arith.negf %83 : vector<8x32xf32>
    %85 = math.exp %84 : vector<8x32xf32>
    %cst_27 = arith.constant 1.000000e+00 : f32
    %86 = vector.broadcast %cst_27 : f32 to vector<8x32xf32>
    %87 = arith.addf %86, %85 : vector<8x32xf32>
    %88 = arith.divf %86, %87 : vector<8x32xf32>
    %89 = vector.extract_strided_slice %68 {offsets = [0, 64], sizes = [8, 32], strides = [1, 1]} : vector<8x96xf32> to vector<8x32xf32>
    %90 = vector.extract_strided_slice %72 {offsets = [0, 64], sizes = [8, 32], strides = [1, 1]} : vector<8x96xf32> to vector<8x32xf32>
    %91 = arith.mulf %80, %90 : vector<8x32xf32>
    %92 = arith.addf %89, %91 : vector<8x32xf32>
    %93 = math.tanh %92 : vector<8x32xf32>
    %cst_28 = arith.constant 1.000000e+00 : f32
    %94 = vector.broadcast %cst_28 : f32 to vector<8x32xf32>
    %95 = arith.subf %94, %88 : vector<8x32xf32>
    %96 = arith.mulf %95, %93 : vector<8x32xf32>
    %97 = arith.mulf %88, %40 : vector<8x32xf32>
    %98 = arith.addf %96, %97 : vector<8x32xf32>
    %99 = tpu.concatenate %98, %67 in 1 : vector<8x32xf32>, vector<8x32xf32> -> vector<8x64xf32>
    %c0_29 = arith.constant 0 : index
    %c0_30 = arith.constant 0 : index
    %100 = vector.load %arg5[%c0_29, %c0_30] : memref<64x128xf32, #tpu.memory_space<vmem>>, vector<64x128xf32>
    %cst_31 = arith.constant dense<0.000000e+00> : vector<8x128xf32>
    %101 = tpu.matmul %99, %100, %cst_31 {dimension_numbers = #tpu.dot_dimension_numbers<[1], [0], [0], [1], [0, 0, 1, 1], [], []>} : vector<8x64xf32>, vector<64x128xf32>, vector<8x128xf32> -> vector<8x128xf32>
    %102 = vector.broadcast %7 : vector<1x128xf32> to vector<8x128xf32>
    %103 = arith.addf %101, %102 : vector<8x128xf32>
    %104 = vector.extract_strided_slice %103 {offsets = [0, 0], sizes = [8, 32], strides = [1, 1]} : vector<8x128xf32> to vector<8x32xf32>
    %105 = arith.negf %104 : vector<8x32xf32>
    %106 = math.exp %105 : vector<8x32xf32>
    %cst_32 = arith.constant 1.000000e+00 : f32
    %107 = vector.broadcast %cst_32 : f32 to vector<8x32xf32>
    %108 = arith.addf %107, %106 : vector<8x32xf32>
    %109 = arith.divf %107, %108 : vector<8x32xf32>
    %110 = vector.extract_strided_slice %103 {offsets = [0, 32], sizes = [8, 32], strides = [1, 1]} : vector<8x128xf32> to vector<8x32xf32>
    %111 = arith.negf %110 : vector<8x32xf32>
    %112 = math.exp %111 : vector<8x32xf32>
    %cst_33 = arith.constant 1.000000e+00 : f32
    %113 = vector.broadcast %cst_33 : f32 to vector<8x32xf32>
    %114 = arith.addf %113, %112 : vector<8x32xf32>
    %115 = arith.divf %113, %114 : vector<8x32xf32>
    %116 = vector.extract_strided_slice %103 {offsets = [0, 64], sizes = [8, 32], strides = [1, 1]} : vector<8x128xf32> to vector<8x32xf32>
    %117 = vector.extract_strided_slice %103 {offsets = [0, 96], sizes = [8, 32], strides = [1, 1]} : vector<8x128xf32> to vector<8x32xf32>
    %118 = arith.mulf %109, %117 : vector<8x32xf32>
    %119 = arith.addf %116, %118 : vector<8x32xf32>
    %120 = math.tanh %119 : vector<8x32xf32>
    %cst_34 = arith.constant 1.000000e+00 : f32
    %121 = vector.broadcast %cst_34 : f32 to vector<8x32xf32>
    %122 = arith.subf %121, %115 : vector<8x32xf32>
    %123 = arith.mulf %122, %120 : vector<8x32xf32>
    %124 = arith.mulf %115, %67 : vector<8x32xf32>
    %125 = arith.addf %123, %124 : vector<8x32xf32>
    %126 = vector.extract_strided_slice %5 {offsets = [16, 0], sizes = [8, 96], strides = [1, 1]} : vector<64x96xf32> to vector<8x96xf32>
    %c0_35 = arith.constant 0 : index
    %c0_36 = arith.constant 0 : index
    %127 = vector.load %arg2[%c0_35, %c0_36] : memref<32x96xf32, #tpu.memory_space<vmem>>, vector<32x96xf32>
    %cst_37 = arith.constant dense<0.000000e+00> : vector<8x96xf32>
    %128 = tpu.matmul %98, %127, %cst_37 {dimension_numbers = #tpu.dot_dimension_numbers<[1], [0], [0], [1], [0, 0, 1, 1], [], []>} : vector<8x32xf32>, vector<32x96xf32>, vector<8x96xf32> -> vector<8x96xf32>
    %129 = vector.broadcast %6 : vector<1x96xf32> to vector<8x96xf32>
    %130 = arith.addf %128, %129 : vector<8x96xf32>
    %131 = vector.extract_strided_slice %126 {offsets = [0, 0], sizes = [8, 32], strides = [1, 1]} : vector<8x96xf32> to vector<8x32xf32>
    %132 = vector.extract_strided_slice %130 {offsets = [0, 0], sizes = [8, 32], strides = [1, 1]} : vector<8x96xf32> to vector<8x32xf32>
    %133 = arith.addf %131, %132 : vector<8x32xf32>
    %134 = arith.negf %133 : vector<8x32xf32>
    %135 = math.exp %134 : vector<8x32xf32>
    %cst_38 = arith.constant 1.000000e+00 : f32
    %136 = vector.broadcast %cst_38 : f32 to vector<8x32xf32>
    %137 = arith.addf %136, %135 : vector<8x32xf32>
    %138 = arith.divf %136, %137 : vector<8x32xf32>
    %139 = vector.extract_strided_slice %126 {offsets = [0, 32], sizes = [8, 32], strides = [1, 1]} : vector<8x96xf32> to vector<8x32xf32>
    %140 = vector.extract_strided_slice %130 {offsets = [0, 32], sizes = [8, 32], strides = [1, 1]} : vector<8x96xf32> to vector<8x32xf32>
    %141 = arith.addf %139, %140 : vector<8x32xf32>
    %142 = arith.negf %141 : vector<8x32xf32>
    %143 = math.exp %142 : vector<8x32xf32>
    %cst_39 = arith.constant 1.000000e+00 : f32
    %144 = vector.broadcast %cst_39 : f32 to vector<8x32xf32>
    %145 = arith.addf %144, %143 : vector<8x32xf32>
    %146 = arith.divf %144, %145 : vector<8x32xf32>
    %147 = vector.extract_strided_slice %126 {offsets = [0, 64], sizes = [8, 32], strides = [1, 1]} : vector<8x96xf32> to vector<8x32xf32>
    %148 = vector.extract_strided_slice %130 {offsets = [0, 64], sizes = [8, 32], strides = [1, 1]} : vector<8x96xf32> to vector<8x32xf32>
    %149 = arith.mulf %138, %148 : vector<8x32xf32>
    %150 = arith.addf %147, %149 : vector<8x32xf32>
    %151 = math.tanh %150 : vector<8x32xf32>
    %cst_40 = arith.constant 1.000000e+00 : f32
    %152 = vector.broadcast %cst_40 : f32 to vector<8x32xf32>
    %153 = arith.subf %152, %146 : vector<8x32xf32>
    %154 = arith.mulf %153, %151 : vector<8x32xf32>
    %155 = arith.mulf %146, %98 : vector<8x32xf32>
    %156 = arith.addf %154, %155 : vector<8x32xf32>
    %157 = tpu.concatenate %156, %125 in 1 : vector<8x32xf32>, vector<8x32xf32> -> vector<8x64xf32>
    %c0_41 = arith.constant 0 : index
    %c0_42 = arith.constant 0 : index
    %158 = vector.load %arg5[%c0_41, %c0_42] : memref<64x128xf32, #tpu.memory_space<vmem>>, vector<64x128xf32>
    %cst_43 = arith.constant dense<0.000000e+00> : vector<8x128xf32>
    %159 = tpu.matmul %157, %158, %cst_43 {dimension_numbers = #tpu.dot_dimension_numbers<[1], [0], [0], [1], [0, 0, 1, 1], [], []>} : vector<8x64xf32>, vector<64x128xf32>, vector<8x128xf32> -> vector<8x128xf32>
    %160 = vector.broadcast %7 : vector<1x128xf32> to vector<8x128xf32>
    %161 = arith.addf %159, %160 : vector<8x128xf32>
    %162 = vector.extract_strided_slice %161 {offsets = [0, 0], sizes = [8, 32], strides = [1, 1]} : vector<8x128xf32> to vector<8x32xf32>
    %163 = arith.negf %162 : vector<8x32xf32>
    %164 = math.exp %163 : vector<8x32xf32>
    %cst_44 = arith.constant 1.000000e+00 : f32
    %165 = vector.broadcast %cst_44 : f32 to vector<8x32xf32>
    %166 = arith.addf %165, %164 : vector<8x32xf32>
    %167 = arith.divf %165, %166 : vector<8x32xf32>
    %168 = vector.extract_strided_slice %161 {offsets = [0, 32], sizes = [8, 32], strides = [1, 1]} : vector<8x128xf32> to vector<8x32xf32>
    %169 = arith.negf %168 : vector<8x32xf32>
    %170 = math.exp %169 : vector<8x32xf32>
    %cst_45 = arith.constant 1.000000e+00 : f32
    %171 = vector.broadcast %cst_45 : f32 to vector<8x32xf32>
    %172 = arith.addf %171, %170 : vector<8x32xf32>
    %173 = arith.divf %171, %172 : vector<8x32xf32>
    %174 = vector.extract_strided_slice %161 {offsets = [0, 64], sizes = [8, 32], strides = [1, 1]} : vector<8x128xf32> to vector<8x32xf32>
    %175 = vector.extract_strided_slice %161 {offsets = [0, 96], sizes = [8, 32], strides = [1, 1]} : vector<8x128xf32> to vector<8x32xf32>
    %176 = arith.mulf %167, %175 : vector<8x32xf32>
    %177 = arith.addf %174, %176 : vector<8x32xf32>
    %178 = math.tanh %177 : vector<8x32xf32>
    %cst_46 = arith.constant 1.000000e+00 : f32
    %179 = vector.broadcast %cst_46 : f32 to vector<8x32xf32>
    %180 = arith.subf %179, %173 : vector<8x32xf32>
    %181 = arith.mulf %180, %178 : vector<8x32xf32>
    %182 = arith.mulf %173, %125 : vector<8x32xf32>
    %183 = arith.addf %181, %182 : vector<8x32xf32>
    %184 = vector.extract_strided_slice %5 {offsets = [24, 0], sizes = [8, 96], strides = [1, 1]} : vector<64x96xf32> to vector<8x96xf32>
    %c0_47 = arith.constant 0 : index
    %c0_48 = arith.constant 0 : index
    %185 = vector.load %arg2[%c0_47, %c0_48] : memref<32x96xf32, #tpu.memory_space<vmem>>, vector<32x96xf32>
    %cst_49 = arith.constant dense<0.000000e+00> : vector<8x96xf32>
    %186 = tpu.matmul %156, %185, %cst_49 {dimension_numbers = #tpu.dot_dimension_numbers<[1], [0], [0], [1], [0, 0, 1, 1], [], []>} : vector<8x32xf32>, vector<32x96xf32>, vector<8x96xf32> -> vector<8x96xf32>
    %187 = vector.broadcast %6 : vector<1x96xf32> to vector<8x96xf32>
    %188 = arith.addf %186, %187 : vector<8x96xf32>
    %189 = vector.extract_strided_slice %184 {offsets = [0, 0], sizes = [8, 32], strides = [1, 1]} : vector<8x96xf32> to vector<8x32xf32>
    %190 = vector.extract_strided_slice %188 {offsets = [0, 0], sizes = [8, 32], strides = [1, 1]} : vector<8x96xf32> to vector<8x32xf32>
    %191 = arith.addf %189, %190 : vector<8x32xf32>
    %192 = arith.negf %191 : vector<8x32xf32>
    %193 = math.exp %192 : vector<8x32xf32>
    %cst_50 = arith.constant 1.000000e+00 : f32
    %194 = vector.broadcast %cst_50 : f32 to vector<8x32xf32>
    %195 = arith.addf %194, %193 : vector<8x32xf32>
    %196 = arith.divf %194, %195 : vector<8x32xf32>
    %197 = vector.extract_strided_slice %184 {offsets = [0, 32], sizes = [8, 32], strides = [1, 1]} : vector<8x96xf32> to vector<8x32xf32>
    %198 = vector.extract_strided_slice %188 {offsets = [0, 32], sizes = [8, 32], strides = [1, 1]} : vector<8x96xf32> to vector<8x32xf32>
    %199 = arith.addf %197, %198 : vector<8x32xf32>
    %200 = arith.negf %199 : vector<8x32xf32>
    %201 = math.exp %200 : vector<8x32xf32>
    %cst_51 = arith.constant 1.000000e+00 : f32
    %202 = vector.broadcast %cst_51 : f32 to vector<8x32xf32>
    %203 = arith.addf %202, %201 : vector<8x32xf32>
    %204 = arith.divf %202, %203 : vector<8x32xf32>
    %205 = vector.extract_strided_slice %184 {offsets = [0, 64], sizes = [8, 32], strides = [1, 1]} : vector<8x96xf32> to vector<8x32xf32>
    %206 = vector.extract_strided_slice %188 {offsets = [0, 64], sizes = [8, 32], strides = [1, 1]} : vector<8x96xf32> to vector<8x32xf32>
    %207 = arith.mulf %196, %206 : vector<8x32xf32>
    %208 = arith.addf %205, %207 : vector<8x32xf32>
    %209 = math.tanh %208 : vector<8x32xf32>
    %cst_52 = arith.constant 1.000000e+00 : f32
    %210 = vector.broadcast %cst_52 : f32 to vector<8x32xf32>
    %211 = arith.subf %210, %204 : vector<8x32xf32>
    %212 = arith.mulf %211, %209 : vector<8x32xf32>
    %213 = arith.mulf %204, %156 : vector<8x32xf32>
    %214 = arith.addf %212, %213 : vector<8x32xf32>
    %215 = tpu.concatenate %214, %183 in 1 : vector<8x32xf32>, vector<8x32xf32> -> vector<8x64xf32>
    %c0_53 = arith.constant 0 : index
    %c0_54 = arith.constant 0 : index
    %216 = vector.load %arg5[%c0_53, %c0_54] : memref<64x128xf32, #tpu.memory_space<vmem>>, vector<64x128xf32>
    %cst_55 = arith.constant dense<0.000000e+00> : vector<8x128xf32>
    %217 = tpu.matmul %215, %216, %cst_55 {dimension_numbers = #tpu.dot_dimension_numbers<[1], [0], [0], [1], [0, 0, 1, 1], [], []>} : vector<8x64xf32>, vector<64x128xf32>, vector<8x128xf32> -> vector<8x128xf32>
    %218 = vector.broadcast %7 : vector<1x128xf32> to vector<8x128xf32>
    %219 = arith.addf %217, %218 : vector<8x128xf32>
    %220 = vector.extract_strided_slice %219 {offsets = [0, 0], sizes = [8, 32], strides = [1, 1]} : vector<8x128xf32> to vector<8x32xf32>
    %221 = arith.negf %220 : vector<8x32xf32>
    %222 = math.exp %221 : vector<8x32xf32>
    %cst_56 = arith.constant 1.000000e+00 : f32
    %223 = vector.broadcast %cst_56 : f32 to vector<8x32xf32>
    %224 = arith.addf %223, %222 : vector<8x32xf32>
    %225 = arith.divf %223, %224 : vector<8x32xf32>
    %226 = vector.extract_strided_slice %219 {offsets = [0, 32], sizes = [8, 32], strides = [1, 1]} : vector<8x128xf32> to vector<8x32xf32>
    %227 = arith.negf %226 : vector<8x32xf32>
    %228 = math.exp %227 : vector<8x32xf32>
    %cst_57 = arith.constant 1.000000e+00 : f32
    %229 = vector.broadcast %cst_57 : f32 to vector<8x32xf32>
    %230 = arith.addf %229, %228 : vector<8x32xf32>
    %231 = arith.divf %229, %230 : vector<8x32xf32>
    %232 = vector.extract_strided_slice %219 {offsets = [0, 64], sizes = [8, 32], strides = [1, 1]} : vector<8x128xf32> to vector<8x32xf32>
    %233 = vector.extract_strided_slice %219 {offsets = [0, 96], sizes = [8, 32], strides = [1, 1]} : vector<8x128xf32> to vector<8x32xf32>
    %234 = arith.mulf %225, %233 : vector<8x32xf32>
    %235 = arith.addf %232, %234 : vector<8x32xf32>
    %236 = math.tanh %235 : vector<8x32xf32>
    %cst_58 = arith.constant 1.000000e+00 : f32
    %237 = vector.broadcast %cst_58 : f32 to vector<8x32xf32>
    %238 = arith.subf %237, %231 : vector<8x32xf32>
    %239 = arith.mulf %238, %236 : vector<8x32xf32>
    %240 = arith.mulf %231, %183 : vector<8x32xf32>
    %241 = arith.addf %239, %240 : vector<8x32xf32>
    %242 = vector.extract_strided_slice %5 {offsets = [32, 0], sizes = [8, 96], strides = [1, 1]} : vector<64x96xf32> to vector<8x96xf32>
    %c0_59 = arith.constant 0 : index
    %c0_60 = arith.constant 0 : index
    %243 = vector.load %arg2[%c0_59, %c0_60] : memref<32x96xf32, #tpu.memory_space<vmem>>, vector<32x96xf32>
    %cst_61 = arith.constant dense<0.000000e+00> : vector<8x96xf32>
    %244 = tpu.matmul %214, %243, %cst_61 {dimension_numbers = #tpu.dot_dimension_numbers<[1], [0], [0], [1], [0, 0, 1, 1], [], []>} : vector<8x32xf32>, vector<32x96xf32>, vector<8x96xf32> -> vector<8x96xf32>
    %245 = vector.broadcast %6 : vector<1x96xf32> to vector<8x96xf32>
    %246 = arith.addf %244, %245 : vector<8x96xf32>
    %247 = vector.extract_strided_slice %242 {offsets = [0, 0], sizes = [8, 32], strides = [1, 1]} : vector<8x96xf32> to vector<8x32xf32>
    %248 = vector.extract_strided_slice %246 {offsets = [0, 0], sizes = [8, 32], strides = [1, 1]} : vector<8x96xf32> to vector<8x32xf32>
    %249 = arith.addf %247, %248 : vector<8x32xf32>
    %250 = arith.negf %249 : vector<8x32xf32>
    %251 = math.exp %250 : vector<8x32xf32>
    %cst_62 = arith.constant 1.000000e+00 : f32
    %252 = vector.broadcast %cst_62 : f32 to vector<8x32xf32>
    %253 = arith.addf %252, %251 : vector<8x32xf32>
    %254 = arith.divf %252, %253 : vector<8x32xf32>
    %255 = vector.extract_strided_slice %242 {offsets = [0, 32], sizes = [8, 32], strides = [1, 1]} : vector<8x96xf32> to vector<8x32xf32>
    %256 = vector.extract_strided_slice %246 {offsets = [0, 32], sizes = [8, 32], strides = [1, 1]} : vector<8x96xf32> to vector<8x32xf32>
    %257 = arith.addf %255, %256 : vector<8x32xf32>
    %258 = arith.negf %257 : vector<8x32xf32>
    %259 = math.exp %258 : vector<8x32xf32>
    %cst_63 = arith.constant 1.000000e+00 : f32
    %260 = vector.broadcast %cst_63 : f32 to vector<8x32xf32>
    %261 = arith.addf %260, %259 : vector<8x32xf32>
    %262 = arith.divf %260, %261 : vector<8x32xf32>
    %263 = vector.extract_strided_slice %242 {offsets = [0, 64], sizes = [8, 32], strides = [1, 1]} : vector<8x96xf32> to vector<8x32xf32>
    %264 = vector.extract_strided_slice %246 {offsets = [0, 64], sizes = [8, 32], strides = [1, 1]} : vector<8x96xf32> to vector<8x32xf32>
    %265 = arith.mulf %254, %264 : vector<8x32xf32>
    %266 = arith.addf %263, %265 : vector<8x32xf32>
    %267 = math.tanh %266 : vector<8x32xf32>
    %cst_64 = arith.constant 1.000000e+00 : f32
    %268 = vector.broadcast %cst_64 : f32 to vector<8x32xf32>
    %269 = arith.subf %268, %262 : vector<8x32xf32>
    %270 = arith.mulf %269, %267 : vector<8x32xf32>
    %271 = arith.mulf %262, %214 : vector<8x32xf32>
    %272 = arith.addf %270, %271 : vector<8x32xf32>
    %273 = tpu.concatenate %272, %241 in 1 : vector<8x32xf32>, vector<8x32xf32> -> vector<8x64xf32>
    %c0_65 = arith.constant 0 : index
    %c0_66 = arith.constant 0 : index
    %274 = vector.load %arg5[%c0_65, %c0_66] : memref<64x128xf32, #tpu.memory_space<vmem>>, vector<64x128xf32>
    %cst_67 = arith.constant dense<0.000000e+00> : vector<8x128xf32>
    %275 = tpu.matmul %273, %274, %cst_67 {dimension_numbers = #tpu.dot_dimension_numbers<[1], [0], [0], [1], [0, 0, 1, 1], [], []>} : vector<8x64xf32>, vector<64x128xf32>, vector<8x128xf32> -> vector<8x128xf32>
    %276 = vector.broadcast %7 : vector<1x128xf32> to vector<8x128xf32>
    %277 = arith.addf %275, %276 : vector<8x128xf32>
    %278 = vector.extract_strided_slice %277 {offsets = [0, 0], sizes = [8, 32], strides = [1, 1]} : vector<8x128xf32> to vector<8x32xf32>
    %279 = arith.negf %278 : vector<8x32xf32>
    %280 = math.exp %279 : vector<8x32xf32>
    %cst_68 = arith.constant 1.000000e+00 : f32
    %281 = vector.broadcast %cst_68 : f32 to vector<8x32xf32>
    %282 = arith.addf %281, %280 : vector<8x32xf32>
    %283 = arith.divf %281, %282 : vector<8x32xf32>
    %284 = vector.extract_strided_slice %277 {offsets = [0, 32], sizes = [8, 32], strides = [1, 1]} : vector<8x128xf32> to vector<8x32xf32>
    %285 = arith.negf %284 : vector<8x32xf32>
    %286 = math.exp %285 : vector<8x32xf32>
    %cst_69 = arith.constant 1.000000e+00 : f32
    %287 = vector.broadcast %cst_69 : f32 to vector<8x32xf32>
    %288 = arith.addf %287, %286 : vector<8x32xf32>
    %289 = arith.divf %287, %288 : vector<8x32xf32>
    %290 = vector.extract_strided_slice %277 {offsets = [0, 64], sizes = [8, 32], strides = [1, 1]} : vector<8x128xf32> to vector<8x32xf32>
    %291 = vector.extract_strided_slice %277 {offsets = [0, 96], sizes = [8, 32], strides = [1, 1]} : vector<8x128xf32> to vector<8x32xf32>
    %292 = arith.mulf %283, %291 : vector<8x32xf32>
    %293 = arith.addf %290, %292 : vector<8x32xf32>
    %294 = math.tanh %293 : vector<8x32xf32>
    %cst_70 = arith.constant 1.000000e+00 : f32
    %295 = vector.broadcast %cst_70 : f32 to vector<8x32xf32>
    %296 = arith.subf %295, %289 : vector<8x32xf32>
    %297 = arith.mulf %296, %294 : vector<8x32xf32>
    %298 = arith.mulf %289, %241 : vector<8x32xf32>
    %299 = arith.addf %297, %298 : vector<8x32xf32>
    %300 = vector.extract_strided_slice %5 {offsets = [40, 0], sizes = [8, 96], strides = [1, 1]} : vector<64x96xf32> to vector<8x96xf32>
    %c0_71 = arith.constant 0 : index
    %c0_72 = arith.constant 0 : index
    %301 = vector.load %arg2[%c0_71, %c0_72] : memref<32x96xf32, #tpu.memory_space<vmem>>, vector<32x96xf32>
    %cst_73 = arith.constant dense<0.000000e+00> : vector<8x96xf32>
    %302 = tpu.matmul %272, %301, %cst_73 {dimension_numbers = #tpu.dot_dimension_numbers<[1], [0], [0], [1], [0, 0, 1, 1], [], []>} : vector<8x32xf32>, vector<32x96xf32>, vector<8x96xf32> -> vector<8x96xf32>
    %303 = vector.broadcast %6 : vector<1x96xf32> to vector<8x96xf32>
    %304 = arith.addf %302, %303 : vector<8x96xf32>
    %305 = vector.extract_strided_slice %300 {offsets = [0, 0], sizes = [8, 32], strides = [1, 1]} : vector<8x96xf32> to vector<8x32xf32>
    %306 = vector.extract_strided_slice %304 {offsets = [0, 0], sizes = [8, 32], strides = [1, 1]} : vector<8x96xf32> to vector<8x32xf32>
    %307 = arith.addf %305, %306 : vector<8x32xf32>
    %308 = arith.negf %307 : vector<8x32xf32>
    %309 = math.exp %308 : vector<8x32xf32>
    %cst_74 = arith.constant 1.000000e+00 : f32
    %310 = vector.broadcast %cst_74 : f32 to vector<8x32xf32>
    %311 = arith.addf %310, %309 : vector<8x32xf32>
    %312 = arith.divf %310, %311 : vector<8x32xf32>
    %313 = vector.extract_strided_slice %300 {offsets = [0, 32], sizes = [8, 32], strides = [1, 1]} : vector<8x96xf32> to vector<8x32xf32>
    %314 = vector.extract_strided_slice %304 {offsets = [0, 32], sizes = [8, 32], strides = [1, 1]} : vector<8x96xf32> to vector<8x32xf32>
    %315 = arith.addf %313, %314 : vector<8x32xf32>
    %316 = arith.negf %315 : vector<8x32xf32>
    %317 = math.exp %316 : vector<8x32xf32>
    %cst_75 = arith.constant 1.000000e+00 : f32
    %318 = vector.broadcast %cst_75 : f32 to vector<8x32xf32>
    %319 = arith.addf %318, %317 : vector<8x32xf32>
    %320 = arith.divf %318, %319 : vector<8x32xf32>
    %321 = vector.extract_strided_slice %300 {offsets = [0, 64], sizes = [8, 32], strides = [1, 1]} : vector<8x96xf32> to vector<8x32xf32>
    %322 = vector.extract_strided_slice %304 {offsets = [0, 64], sizes = [8, 32], strides = [1, 1]} : vector<8x96xf32> to vector<8x32xf32>
    %323 = arith.mulf %312, %322 : vector<8x32xf32>
    %324 = arith.addf %321, %323 : vector<8x32xf32>
    %325 = math.tanh %324 : vector<8x32xf32>
    %cst_76 = arith.constant 1.000000e+00 : f32
    %326 = vector.broadcast %cst_76 : f32 to vector<8x32xf32>
    %327 = arith.subf %326, %320 : vector<8x32xf32>
    %328 = arith.mulf %327, %325 : vector<8x32xf32>
    %329 = arith.mulf %320, %272 : vector<8x32xf32>
    %330 = arith.addf %328, %329 : vector<8x32xf32>
    %331 = tpu.concatenate %330, %299 in 1 : vector<8x32xf32>, vector<8x32xf32> -> vector<8x64xf32>
    %c0_77 = arith.constant 0 : index
    %c0_78 = arith.constant 0 : index
    %332 = vector.load %arg5[%c0_77, %c0_78] : memref<64x128xf32, #tpu.memory_space<vmem>>, vector<64x128xf32>
    %cst_79 = arith.constant dense<0.000000e+00> : vector<8x128xf32>
    %333 = tpu.matmul %331, %332, %cst_79 {dimension_numbers = #tpu.dot_dimension_numbers<[1], [0], [0], [1], [0, 0, 1, 1], [], []>} : vector<8x64xf32>, vector<64x128xf32>, vector<8x128xf32> -> vector<8x128xf32>
    %334 = vector.broadcast %7 : vector<1x128xf32> to vector<8x128xf32>
    %335 = arith.addf %333, %334 : vector<8x128xf32>
    %336 = vector.extract_strided_slice %335 {offsets = [0, 0], sizes = [8, 32], strides = [1, 1]} : vector<8x128xf32> to vector<8x32xf32>
    %337 = arith.negf %336 : vector<8x32xf32>
    %338 = math.exp %337 : vector<8x32xf32>
    %cst_80 = arith.constant 1.000000e+00 : f32
    %339 = vector.broadcast %cst_80 : f32 to vector<8x32xf32>
    %340 = arith.addf %339, %338 : vector<8x32xf32>
    %341 = arith.divf %339, %340 : vector<8x32xf32>
    %342 = vector.extract_strided_slice %335 {offsets = [0, 32], sizes = [8, 32], strides = [1, 1]} : vector<8x128xf32> to vector<8x32xf32>
    %343 = arith.negf %342 : vector<8x32xf32>
    %344 = math.exp %343 : vector<8x32xf32>
    %cst_81 = arith.constant 1.000000e+00 : f32
    %345 = vector.broadcast %cst_81 : f32 to vector<8x32xf32>
    %346 = arith.addf %345, %344 : vector<8x32xf32>
    %347 = arith.divf %345, %346 : vector<8x32xf32>
    %348 = vector.extract_strided_slice %335 {offsets = [0, 64], sizes = [8, 32], strides = [1, 1]} : vector<8x128xf32> to vector<8x32xf32>
    %349 = vector.extract_strided_slice %335 {offsets = [0, 96], sizes = [8, 32], strides = [1, 1]} : vector<8x128xf32> to vector<8x32xf32>
    %350 = arith.mulf %341, %349 : vector<8x32xf32>
    %351 = arith.addf %348, %350 : vector<8x32xf32>
    %352 = math.tanh %351 : vector<8x32xf32>
    %cst_82 = arith.constant 1.000000e+00 : f32
    %353 = vector.broadcast %cst_82 : f32 to vector<8x32xf32>
    %354 = arith.subf %353, %347 : vector<8x32xf32>
    %355 = arith.mulf %354, %352 : vector<8x32xf32>
    %356 = arith.mulf %347, %299 : vector<8x32xf32>
    %357 = arith.addf %355, %356 : vector<8x32xf32>
    %358 = vector.extract_strided_slice %5 {offsets = [48, 0], sizes = [8, 96], strides = [1, 1]} : vector<64x96xf32> to vector<8x96xf32>
    %c0_83 = arith.constant 0 : index
    %c0_84 = arith.constant 0 : index
    %359 = vector.load %arg2[%c0_83, %c0_84] : memref<32x96xf32, #tpu.memory_space<vmem>>, vector<32x96xf32>
    %cst_85 = arith.constant dense<0.000000e+00> : vector<8x96xf32>
    %360 = tpu.matmul %330, %359, %cst_85 {dimension_numbers = #tpu.dot_dimension_numbers<[1], [0], [0], [1], [0, 0, 1, 1], [], []>} : vector<8x32xf32>, vector<32x96xf32>, vector<8x96xf32> -> vector<8x96xf32>
    %361 = vector.broadcast %6 : vector<1x96xf32> to vector<8x96xf32>
    %362 = arith.addf %360, %361 : vector<8x96xf32>
    %363 = vector.extract_strided_slice %358 {offsets = [0, 0], sizes = [8, 32], strides = [1, 1]} : vector<8x96xf32> to vector<8x32xf32>
    %364 = vector.extract_strided_slice %362 {offsets = [0, 0], sizes = [8, 32], strides = [1, 1]} : vector<8x96xf32> to vector<8x32xf32>
    %365 = arith.addf %363, %364 : vector<8x32xf32>
    %366 = arith.negf %365 : vector<8x32xf32>
    %367 = math.exp %366 : vector<8x32xf32>
    %cst_86 = arith.constant 1.000000e+00 : f32
    %368 = vector.broadcast %cst_86 : f32 to vector<8x32xf32>
    %369 = arith.addf %368, %367 : vector<8x32xf32>
    %370 = arith.divf %368, %369 : vector<8x32xf32>
    %371 = vector.extract_strided_slice %358 {offsets = [0, 32], sizes = [8, 32], strides = [1, 1]} : vector<8x96xf32> to vector<8x32xf32>
    %372 = vector.extract_strided_slice %362 {offsets = [0, 32], sizes = [8, 32], strides = [1, 1]} : vector<8x96xf32> to vector<8x32xf32>
    %373 = arith.addf %371, %372 : vector<8x32xf32>
    %374 = arith.negf %373 : vector<8x32xf32>
    %375 = math.exp %374 : vector<8x32xf32>
    %cst_87 = arith.constant 1.000000e+00 : f32
    %376 = vector.broadcast %cst_87 : f32 to vector<8x32xf32>
    %377 = arith.addf %376, %375 : vector<8x32xf32>
    %378 = arith.divf %376, %377 : vector<8x32xf32>
    %379 = vector.extract_strided_slice %358 {offsets = [0, 64], sizes = [8, 32], strides = [1, 1]} : vector<8x96xf32> to vector<8x32xf32>
    %380 = vector.extract_strided_slice %362 {offsets = [0, 64], sizes = [8, 32], strides = [1, 1]} : vector<8x96xf32> to vector<8x32xf32>
    %381 = arith.mulf %370, %380 : vector<8x32xf32>
    %382 = arith.addf %379, %381 : vector<8x32xf32>
    %383 = math.tanh %382 : vector<8x32xf32>
    %cst_88 = arith.constant 1.000000e+00 : f32
    %384 = vector.broadcast %cst_88 : f32 to vector<8x32xf32>
    %385 = arith.subf %384, %378 : vector<8x32xf32>
    %386 = arith.mulf %385, %383 : vector<8x32xf32>
    %387 = arith.mulf %378, %330 : vector<8x32xf32>
    %388 = arith.addf %386, %387 : vector<8x32xf32>
    %389 = tpu.concatenate %388, %357 in 1 : vector<8x32xf32>, vector<8x32xf32> -> vector<8x64xf32>
    %c0_89 = arith.constant 0 : index
    %c0_90 = arith.constant 0 : index
    %390 = vector.load %arg5[%c0_89, %c0_90] : memref<64x128xf32, #tpu.memory_space<vmem>>, vector<64x128xf32>
    %cst_91 = arith.constant dense<0.000000e+00> : vector<8x128xf32>
    %391 = tpu.matmul %389, %390, %cst_91 {dimension_numbers = #tpu.dot_dimension_numbers<[1], [0], [0], [1], [0, 0, 1, 1], [], []>} : vector<8x64xf32>, vector<64x128xf32>, vector<8x128xf32> -> vector<8x128xf32>
    %392 = vector.broadcast %7 : vector<1x128xf32> to vector<8x128xf32>
    %393 = arith.addf %391, %392 : vector<8x128xf32>
    %394 = vector.extract_strided_slice %393 {offsets = [0, 0], sizes = [8, 32], strides = [1, 1]} : vector<8x128xf32> to vector<8x32xf32>
    %395 = arith.negf %394 : vector<8x32xf32>
    %396 = math.exp %395 : vector<8x32xf32>
    %cst_92 = arith.constant 1.000000e+00 : f32
    %397 = vector.broadcast %cst_92 : f32 to vector<8x32xf32>
    %398 = arith.addf %397, %396 : vector<8x32xf32>
    %399 = arith.divf %397, %398 : vector<8x32xf32>
    %400 = vector.extract_strided_slice %393 {offsets = [0, 32], sizes = [8, 32], strides = [1, 1]} : vector<8x128xf32> to vector<8x32xf32>
    %401 = arith.negf %400 : vector<8x32xf32>
    %402 = math.exp %401 : vector<8x32xf32>
    %cst_93 = arith.constant 1.000000e+00 : f32
    %403 = vector.broadcast %cst_93 : f32 to vector<8x32xf32>
    %404 = arith.addf %403, %402 : vector<8x32xf32>
    %405 = arith.divf %403, %404 : vector<8x32xf32>
    %406 = vector.extract_strided_slice %393 {offsets = [0, 64], sizes = [8, 32], strides = [1, 1]} : vector<8x128xf32> to vector<8x32xf32>
    %407 = vector.extract_strided_slice %393 {offsets = [0, 96], sizes = [8, 32], strides = [1, 1]} : vector<8x128xf32> to vector<8x32xf32>
    %408 = arith.mulf %399, %407 : vector<8x32xf32>
    %409 = arith.addf %406, %408 : vector<8x32xf32>
    %410 = math.tanh %409 : vector<8x32xf32>
    %cst_94 = arith.constant 1.000000e+00 : f32
    %411 = vector.broadcast %cst_94 : f32 to vector<8x32xf32>
    %412 = arith.subf %411, %405 : vector<8x32xf32>
    %413 = arith.mulf %412, %410 : vector<8x32xf32>
    %414 = arith.mulf %405, %357 : vector<8x32xf32>
    %415 = arith.addf %413, %414 : vector<8x32xf32>
    %416 = vector.extract_strided_slice %5 {offsets = [56, 0], sizes = [8, 96], strides = [1, 1]} : vector<64x96xf32> to vector<8x96xf32>
    %c0_95 = arith.constant 0 : index
    %c0_96 = arith.constant 0 : index
    %417 = vector.load %arg2[%c0_95, %c0_96] : memref<32x96xf32, #tpu.memory_space<vmem>>, vector<32x96xf32>
    %cst_97 = arith.constant dense<0.000000e+00> : vector<8x96xf32>
    %418 = tpu.matmul %388, %417, %cst_97 {dimension_numbers = #tpu.dot_dimension_numbers<[1], [0], [0], [1], [0, 0, 1, 1], [], []>} : vector<8x32xf32>, vector<32x96xf32>, vector<8x96xf32> -> vector<8x96xf32>
    %419 = vector.broadcast %6 : vector<1x96xf32> to vector<8x96xf32>
    %420 = arith.addf %418, %419 : vector<8x96xf32>
    %421 = vector.extract_strided_slice %416 {offsets = [0, 0], sizes = [8, 32], strides = [1, 1]} : vector<8x96xf32> to vector<8x32xf32>
    %422 = vector.extract_strided_slice %420 {offsets = [0, 0], sizes = [8, 32], strides = [1, 1]} : vector<8x96xf32> to vector<8x32xf32>
    %423 = arith.addf %421, %422 : vector<8x32xf32>
    %424 = arith.negf %423 : vector<8x32xf32>
    %425 = math.exp %424 : vector<8x32xf32>
    %cst_98 = arith.constant 1.000000e+00 : f32
    %426 = vector.broadcast %cst_98 : f32 to vector<8x32xf32>
    %427 = arith.addf %426, %425 : vector<8x32xf32>
    %428 = arith.divf %426, %427 : vector<8x32xf32>
    %429 = vector.extract_strided_slice %416 {offsets = [0, 32], sizes = [8, 32], strides = [1, 1]} : vector<8x96xf32> to vector<8x32xf32>
    %430 = vector.extract_strided_slice %420 {offsets = [0, 32], sizes = [8, 32], strides = [1, 1]} : vector<8x96xf32> to vector<8x32xf32>
    %431 = arith.addf %429, %430 : vector<8x32xf32>
    %432 = arith.negf %431 : vector<8x32xf32>
    %433 = math.exp %432 : vector<8x32xf32>
    %cst_99 = arith.constant 1.000000e+00 : f32
    %434 = vector.broadcast %cst_99 : f32 to vector<8x32xf32>
    %435 = arith.addf %434, %433 : vector<8x32xf32>
    %436 = arith.divf %434, %435 : vector<8x32xf32>
    %437 = vector.extract_strided_slice %416 {offsets = [0, 64], sizes = [8, 32], strides = [1, 1]} : vector<8x96xf32> to vector<8x32xf32>
    %438 = vector.extract_strided_slice %420 {offsets = [0, 64], sizes = [8, 32], strides = [1, 1]} : vector<8x96xf32> to vector<8x32xf32>
    %439 = arith.mulf %428, %438 : vector<8x32xf32>
    %440 = arith.addf %437, %439 : vector<8x32xf32>
    %441 = math.tanh %440 : vector<8x32xf32>
    %cst_100 = arith.constant 1.000000e+00 : f32
    %442 = vector.broadcast %cst_100 : f32 to vector<8x32xf32>
    %443 = arith.subf %442, %436 : vector<8x32xf32>
    %444 = arith.mulf %443, %441 : vector<8x32xf32>
    %445 = arith.mulf %436, %388 : vector<8x32xf32>
    %446 = arith.addf %444, %445 : vector<8x32xf32>
    %447 = tpu.concatenate %446, %415 in 1 : vector<8x32xf32>, vector<8x32xf32> -> vector<8x64xf32>
    %c0_101 = arith.constant 0 : index
    %c0_102 = arith.constant 0 : index
    %448 = vector.load %arg5[%c0_101, %c0_102] : memref<64x128xf32, #tpu.memory_space<vmem>>, vector<64x128xf32>
    %cst_103 = arith.constant dense<0.000000e+00> : vector<8x128xf32>
    %449 = tpu.matmul %447, %448, %cst_103 {dimension_numbers = #tpu.dot_dimension_numbers<[1], [0], [0], [1], [0, 0, 1, 1], [], []>} : vector<8x64xf32>, vector<64x128xf32>, vector<8x128xf32> -> vector<8x128xf32>
    %450 = vector.broadcast %7 : vector<1x128xf32> to vector<8x128xf32>
    %451 = arith.addf %449, %450 : vector<8x128xf32>
    %452 = vector.extract_strided_slice %451 {offsets = [0, 0], sizes = [8, 32], strides = [1, 1]} : vector<8x128xf32> to vector<8x32xf32>
    %453 = arith.negf %452 : vector<8x32xf32>
    %454 = math.exp %453 : vector<8x32xf32>
    %cst_104 = arith.constant 1.000000e+00 : f32
    %455 = vector.broadcast %cst_104 : f32 to vector<8x32xf32>
    %456 = arith.addf %455, %454 : vector<8x32xf32>
    %457 = arith.divf %455, %456 : vector<8x32xf32>
    %458 = vector.extract_strided_slice %451 {offsets = [0, 32], sizes = [8, 32], strides = [1, 1]} : vector<8x128xf32> to vector<8x32xf32>
    %459 = arith.negf %458 : vector<8x32xf32>
    %460 = math.exp %459 : vector<8x32xf32>
    %cst_105 = arith.constant 1.000000e+00 : f32
    %461 = vector.broadcast %cst_105 : f32 to vector<8x32xf32>
    %462 = arith.addf %461, %460 : vector<8x32xf32>
    %463 = arith.divf %461, %462 : vector<8x32xf32>
    %464 = vector.extract_strided_slice %451 {offsets = [0, 64], sizes = [8, 32], strides = [1, 1]} : vector<8x128xf32> to vector<8x32xf32>
    %465 = vector.extract_strided_slice %451 {offsets = [0, 96], sizes = [8, 32], strides = [1, 1]} : vector<8x128xf32> to vector<8x32xf32>
    %466 = arith.mulf %457, %465 : vector<8x32xf32>
    %467 = arith.addf %464, %466 : vector<8x32xf32>
    %468 = math.tanh %467 : vector<8x32xf32>
    %cst_106 = arith.constant 1.000000e+00 : f32
    %469 = vector.broadcast %cst_106 : f32 to vector<8x32xf32>
    %470 = arith.subf %469, %463 : vector<8x32xf32>
    %471 = arith.mulf %470, %468 : vector<8x32xf32>
    %472 = arith.mulf %463, %415 : vector<8x32xf32>
    %473 = arith.addf %471, %472 : vector<8x32xf32>
    %c0_107 = arith.constant 0 : index
    %c0_108 = arith.constant 0 : index
    %474 = vector.load %arg7[%c0_107, %c0_108] : memref<32x64xf32, #tpu.memory_space<vmem>>, vector<32x64xf32>
    %cst_109 = arith.constant dense<0.000000e+00> : vector<8x64xf32>
    %475 = tpu.matmul %473, %474, %cst_109 {dimension_numbers = #tpu.dot_dimension_numbers<[1], [0], [0], [1], [0, 0, 1, 1], [], []>} : vector<8x32xf32>, vector<32x64xf32>, vector<8x64xf32> -> vector<8x64xf32>
    %c0_110 = arith.constant 0 : index
    %c0_111 = arith.constant 0 : index
    %476 = vector.load %arg8[%c0_110, %c0_111] : memref<1x64xf32, #tpu.memory_space<vmem>>, vector<1x64xf32>
    %477 = vector.broadcast %476 : vector<1x64xf32> to vector<8x64xf32>
    %478 = arith.addf %475, %477 : vector<8x64xf32>
    %cst_112 = arith.constant 0.000000e+00 : f32
    %479 = vector.broadcast %cst_112 : f32 to vector<8x64xf32>
    %480 = arith.maximumf %478, %479 : vector<8x64xf32>
    %c0_113 = arith.constant 0 : index
    %c0_114 = arith.constant 0 : index
    %481 = vector.load %arg9[%c0_113, %c0_114] : memref<64x128xf32, #tpu.memory_space<vmem>>, vector<64x128xf32>
    %cst_115 = arith.constant dense<0.000000e+00> : vector<8x128xf32>
    %482 = tpu.matmul %480, %481, %cst_115 {dimension_numbers = #tpu.dot_dimension_numbers<[1], [0], [0], [1], [0, 0, 1, 1], [], []>} : vector<8x64xf32>, vector<64x128xf32>, vector<8x128xf32> -> vector<8x128xf32>
    %c0_116 = arith.constant 0 : index
    %c0_117 = arith.constant 0 : index
    %483 = vector.load %arg10[%c0_116, %c0_117] : memref<1x128xf32, #tpu.memory_space<vmem>>, vector<1x128xf32>
    %484 = vector.broadcast %483 : vector<1x128xf32> to vector<8x128xf32>
    %485 = arith.addf %482, %484 : vector<8x128xf32>
    %c0_118 = arith.constant 0 : index
    %c0_119 = arith.constant 0 : index
    %486 = vector.load %arg11[%c0_118, %c0_119] : memref<8x128xf32, #tpu.memory_space<vmem>>, vector<8x128xf32>
    tpu.vector_store %arg11[%c0_118, %c0_119], %485 {strides = array<i32>} : memref<8x128xf32, #tpu.memory_space<vmem>>, vector<8x128xf32>,
    return
  }
}

</mosaic_0001>

<llo_original>
// kernel: gru_model_forward.1
$region0: #{gru_model_forward.1}
  #allocation0 [shape = 'u32[]', space=smem, size = 0x4, offset = 0x4, fixed_abs, tag = 'smem constant byte address 0x4 - core index']
  #allocation1 [shape = 'u32[72,128]{1,0:T(1,128)}', space=vmem, size = 0x9000, scoped, tag = 'internal scratch']
  %s0 = inlined_call_operand.vmem [shape: f32[64,16], index: 0, kind: input, shape index: {}]
  %s1 = inlined_call_operand.hbm [shape: f32[16,96], index: 1, kind: input, shape index: {}]
  %s2 = inlined_call_operand.hbm [shape: f32[32,96], index: 2, kind: input, shape index: {}]
  %s3 = inlined_call_operand.vmem [shape: f32[1,96], index: 3, kind: input, shape index: {}]
  %s4 = inlined_call_operand.vmem [shape: f32[1,96], index: 4, kind: input, shape index: {}]
  %s5 = inlined_call_operand.vmem [shape: f32[64,128], index: 5, kind: input, shape index: {}]
  %s6 = inlined_call_operand.vmem [shape: f32[1,128], index: 6, kind: input, shape index: {}]
  %s7 = inlined_call_operand.hbm [shape: f32[32,64], index: 7, kind: input, shape index: {}]
  %s8 = inlined_call_operand.vmem [shape: f32[1,64], index: 8, kind: input, shape index: {}]
  %s9 = inlined_call_operand.vmem [shape: f32[64,128], index: 9, kind: input, shape index: {}]
  %s10 = inlined_call_operand.vmem [shape: f32[1,128], index: 10, kind: input, shape index: {}]
  %s11 = inlined_call_operand.vmem [shape: f32[8,128], index: 11, kind: output, shape index: {}]
  %s12 = sld [smem:[#allocation0]]
  $region66: #{gru_model_forward.1} parent=0
    _
  %s14 = ssub.s32 1, %s12
  %s15 = scalar_select 0, %s14, %s12
  $region1: #{gru_model_forward.1} parent=0
    #allocation2 [shape = 'u8[8192]{0}', space=vmem, size = 0x2000, scoped, tag = 'input window, operand 1, single buffered']
    #allocation3 [shape = 's32[1]{0}', space=sflag, size = 0x4, scoped, tag = 'scoped memory for gru_model_forward.1']
    #allocation4 [shape = 'u8[16384]{0}', space=vmem, size = 0x4000, scoped, tag = 'input window, operand 2, single buffered']
    #allocation5 [shape = 's32[1]{0}', space=sflag, size = 0x4, scoped, tag = 'scoped memory for gru_model_forward.1']
    #allocation6 [shape = 'u8[16384]{0}', space=vmem, size = 0x4000, scoped, tag = 'input window, operand 7, single buffered']
    %16 = vsyncpa [#allocation3], 0
    %17 = vsyncpa [#allocation5], 0
    // Predicated region
    $region2: #{gru_model_forward.1} parent=1 // pred_check
      _
    $region3: #{gru_model_forward.1} parent=1 // pred_check_branch
      %19 = sbr.rel (0) target = $region5
    $region4: #{gru_model_forward.1} parent=1 // pred_region
      _
    $region5: #{gru_model_forward.1} parent=1 // pred_fallthru
      _
    // Predicated region
    $region6: #{gru_model_forward.1} parent=1 // pred_check
      _
    $region7: #{gru_model_forward.1} parent=1 // pred_check_branch
      %21 = sbr.rel (0) target = $region9
    $region8: #{gru_model_forward.1} parent=1 // pred_region
      %23 = vsyncadd [#allocation3], 0
      %s24 = sshll.u32 %s1, 4
      %s25 = int_to_ptr.hbm [resolvable:$true] %s24
      %s26 = sshll.u32 [#allocation2], 4
      %s27 = int_to_ptr.vmem [resolvable:$true] %s26
      %32 = dma.hbm_to_vmem [thread:$0]  %s25, 256, %s27, [#allocation3], 128, 128, 8
    $region9: #{gru_model_forward.1} parent=1 // pred_fallthru
      _
    // Predicated region
    $region10: #{gru_model_forward.1} parent=1 // pred_check
      _
    $region11: #{gru_model_forward.1} parent=1 // pred_check_branch
      %34 = sbr.rel (0) target = $region13
    $region12: #{gru_model_forward.1} parent=1 // pred_region
      %36 = vsyncadd [#allocation5], 0
      %s37 = sshll.u32 %s2, 4
      %s38 = int_to_ptr.hbm [resolvable:$true] %s37
      %s39 = sshll.u32 [#allocation4], 4
      %s40 = int_to_ptr.vmem [resolvable:$true] %s39
      %45 = dma.hbm_to_vmem [thread:$0]  %s38, 512, %s40, [#allocation5], 128, 128, 8
    $region13: #{gru_model_forward.1} parent=1 // pred_fallthru
      _
    // Predicated region
    $region14: #{gru_model_forward.1} parent=1 // pred_check
      _
    $region15: #{gru_model_forward.1} parent=1 // pred_check_branch
      %47 = sbr.rel (0) target = $region17
    $region16: #{gru_model_forward.1} parent=1 // pred_region
      _
    $region17: #{gru_model_forward.1} parent=1 // pred_fallthru
      _
    // Predicated region
    $region18: #{gru_model_forward.1} parent=1 // pred_check
      _
    $region19: #{gru_model_forward.1} parent=1 // pred_check_branch
      %49 = sbr.rel (0) target = $region21
    $region20: #{gru_model_forward.1} parent=1 // pred_region
      _
    $region21: #{gru_model_forward.1} parent=1 // pred_fallthru
      _
    // Predicated region
    $region22: #{gru_model_forward.1} parent=1 // pred_check
      _
    $region23: #{gru_model_forward.1} parent=1 // pred_check_branch
      %51 = sbr.rel (0) target = $region25
    $region24: #{gru_model_forward.1} parent=1 // pred_region
      _
    $region25: #{gru_model_forward.1} parent=1 // pred_fallthru
      _
    // Predicated region
    $region26: #{gru_model_forward.1} parent=1 // pred_check
      _
    $region27: #{gru_model_forward.1} parent=1 // pred_check_branch
      %53 = sbr.rel (0) target = $region29
    $region28: #{gru_model_forward.1} parent=1 // pred_region
      _
    $region29: #{gru_model_forward.1} parent=1 // pred_fallthru
      _
    // Predicated region
    $region30: #{gru_model_forward.1} parent=1 // pred_check
      _
    $region31: #{gru_model_forward.1} parent=1 // pred_check_branch
      %55 = sbr.rel (0) target = $region33
    $region32: #{gru_model_forward.1} parent=1 // pred_region
      %57 = vsyncadd [#allocation5], 0
      %s58 = sshll.u32 %s7, 4
      %s59 = int_to_ptr.hbm [resolvable:$true] %s58
      %s60 = sshll.u32 [#allocation6], 4
      %s61 = int_to_ptr.vmem [resolvable:$true] %s60
      %66 = dma.hbm_to_vmem [thread:$0]  %s59, 512, %s61, [#allocation5], 128, 128, 8
    $region33: #{gru_model_forward.1} parent=1 // pred_fallthru
      _
    // Predicated region
    $region34: #{gru_model_forward.1} parent=1 // pred_check
      _
    $region35: #{gru_model_forward.1} parent=1 // pred_check_branch
      %68 = sbr.rel (0) target = $region37
    $region36: #{gru_model_forward.1} parent=1 // pred_region
      _
    $region37: #{gru_model_forward.1} parent=1 // pred_fallthru
      _
    // Predicated region
    $region38: #{gru_model_forward.1} parent=1 // pred_check
      _
    $region39: #{gru_model_forward.1} parent=1 // pred_check_branch
      %70 = sbr.rel (0) target = $region41
    $region40: #{gru_model_forward.1} parent=1 // pred_region
      _
    $region41: #{gru_model_forward.1} parent=1 // pred_fallthru
      _
    // Predicated region
    $region42: #{gru_model_forward.1} parent=1 // pred_check
      _
    $region43: #{gru_model_forward.1} parent=1 // pred_check_branch
      %72 = sbr.rel (0) target = $region45
    $region44: #{gru_model_forward.1} parent=1 // pred_region
      _
    $region45: #{gru_model_forward.1} parent=1 // pred_fallthru
      _
    // Predicated region
    $region46: #{gru_model_forward.1} parent=1 // pred_check
      _
    $region47: #{gru_model_forward.1} parent=1 // pred_check_branch
      %74 = sbr.rel (0) target = $region49
    $region48: #{gru_model_forward.1} parent=1 // pred_region
      %76 = dma.done [#allocation3], 256
    $region49: #{gru_model_forward.1} parent=1 // pred_fallthru
      _
    // Predicated region
    $region50: #{gru_model_forward.1} parent=1 // pred_check
      _
    $region51: #{gru_model_forward.1} parent=1 // pred_check_branch
      %78 = sbr.rel (0) target = $region53
    $region52: #{gru_model_forward.1} parent=1 // pred_region
      %80 = dma.done [#allocation5], 512
    $region53: #{gru_model_forward.1} parent=1 // pred_fallthru
      _
    // Predicated region
    $region54: #{gru_model_forward.1} parent=1 // pred_check
      _
    $region55: #{gru_model_forward.1} parent=1 // pred_check_branch
      %82 = sbr.rel (0) target = $region57
    $region56: #{gru_model_forward.1} parent=1 // pred_region
      %84 = dma.done [#allocation5], 512
    $region57: #{gru_model_forward.1} parent=1 // pred_fallthru
      _
    %v85 = vld [vmem:[%s0] sm:$0xff]
    %v86 = vld [vmem:[%s0 + $0x8] sm:$0xff]
    %v87 = vld [vmem:[%s0 + $0x10] sm:$0xff]
    %v88 = vld [vmem:[%s0 + $0x18] sm:$0xff]
    %v89 = vld [vmem:[%s0 + $0x20] sm:$0xff]
    %v90 = vld [vmem:[%s0 + $0x28] sm:$0xff]
    %v91 = vld [vmem:[%s0 + $0x30] sm:$0xff]
    %v92 = vld [vmem:[%s0 + $0x38] sm:$0xff]
    %v93 = vld [vmem:[#allocation2] sm:$0xff]
    %v94 = vld [vmem:[#allocation2 + $0x8] sm:$0xff]
    %v95 = vld [vmem:[%s3] sm:$0x1]
    %v97 = vperm.slane %v95, 0
    %vm99 = vcmask 130048
    %v101 = vsel %vm99, %v85, 0
    %v104 = vsel %vm99, %v86, 0
    %v107 = vsel %vm99, %v87, 0
    %v110 = vsel %vm99, %v88, 0
    %v113 = vsel %vm99, %v89, 0
    %v116 = vsel %vm99, %v90, 0
    %v119 = vsel %vm99, %v91, 0
    %v122 = vsel %vm99, %v92, 0
    %124 = vmatpush.msra.mxu0 0.0
    %125 = vmatpush.msra.mxu0 0.0
    %126 = vmatpush.msra.mxu0 0.0
    %127 = vmatpush.msra.mxu0 0.0
    %128 = vmatpush.msra.mxu0 0.0
    %129 = vmatpush.msra.mxu0 0.0
    %130 = vmatpush.msra.mxu0 0.0
    %131 = vmatpush.msra.mxu0 0.0
    %132 = vmatpush.msra.mxu0 0.0
    %133 = vmatpush.msra.mxu0 0.0
    %134 = vmatpush.msra.mxu0 0.0
    %135 = vmatpush.msra.mxu0 0.0
    %136 = vmatpush.msra.mxu0 0.0
    %137 = vmatpush.msra.mxu0 0.0
    %138 = vmatpush.msra.mxu0 %v94
    %139 = vmatpush.msra.mxu0 %v93
    %140 = vmatmul.f32.gmra.mxu0 %v101
    %v141 = vpop.f32.mrf.mxu0
    %v142 = vadd.f32 %v97, %v141
    %143 = vmatmul.f32.gmra.mxu0 %v104
    %v144 = vpop.f32.mrf.mxu0
    %v145 = vadd.f32 %v97, %v144
    %146 = vmatmul.f32.gmra.mxu0 %v107
    %v147 = vpop.f32.mrf.mxu0
    %v148 = vadd.f32 %v97, %v147
    %149 = vmatmul.f32.gmra.mxu0 %v110
    %v150 = vpop.f32.mrf.mxu0
    %v151 = vadd.f32 %v97, %v150
    %152 = vmatmul.f32.gmra.mxu0 %v113
    %v153 = vpop.f32.mrf.mxu0
    %v154 = vadd.f32 %v97, %v153
    %155 = vmatmul.f32.gmra.mxu0 %v116
    %v156 = vpop.f32.mrf.mxu0
    %v157 = vadd.f32 %v97, %v156
    %158 = vmatmul.f32.gmra.mxu0 %v119
    %v159 = vpop.f32.mrf.mxu0
    %v160 = vadd.f32 %v97, %v159
    %161 = vmatmul.f32.gmra.mxu0 %v122
    %v162 = vpop.f32.mrf.mxu0
    %v163 = vadd.f32 %v97, %v162
    %164 = vdwg.mxu0
    %v165 = vld [vmem:[%s4] sm:$0x1]
    %v166 = vld [vmem:[%s6] sm:$0x1]
    %v167 = vld [vmem:[#allocation4] sm:$0xff]
    %v168 = vld [vmem:[#allocation4 + $0x8] sm:$0xff]
    %v169 = vld [vmem:[#allocation4 + $0x10] sm:$0xff]
    %v170 = vld [vmem:[#allocation4 + $0x18] sm:$0xff]
    %v172 = vperm.slane %v165, 0
    %vm174 = vcmask 261120
    %v176 = vsel %vm174, 0.0, 0
    %178 = vmatpush.msra.mxu0 0.0
    %179 = vmatpush.msra.mxu0 0.0
    %180 = vmatpush.msra.mxu0 0.0
    %181 = vmatpush.msra.mxu0 0.0
    %182 = vmatpush.msra.mxu0 0.0
    %183 = vmatpush.msra.mxu0 0.0
    %184 = vmatpush.msra.mxu0 0.0
    %185 = vmatpush.msra.mxu0 0.0
    %186 = vmatpush.msra.mxu0 0.0
    %187 = vmatpush.msra.mxu0 0.0
    %188 = vmatpush.msra.mxu0 0.0
    %189 = vmatpush.msra.mxu0 0.0
    %190 = vmatpush.msra.mxu0 %v170
    %191 = vmatpush.msra.mxu0 %v169
    %192 = vmatpush.msra.mxu0 %v168
    %193 = vmatpush.msra.mxu0 %v167
    %194 = vmatmul.f32.gmra.mxu0 %v176
    %v195 = vpop.f32.mrf.mxu0
    %v196 = vadd.f32 %v172, %v195
    %197 = vdwg.mxu0
    %v198 = vadd.f32 %v142, %v196
    %v199 = vxor.u32 %v198, 2147483648
    %v200 = vmul.f32 %v199, 1.442695
    %v201 = vpow.pop %v200
    %v202 = vadd.f32 %v201, 1.0
    %v203 = vrcp.pop %v202
    %v204 = vmul.f32 %v202, %v203
    %v205 = vsub.f32 1.0, %v204
    %v206 = vmul.f32 %v203, %v205
    %v207 = vadd.f32 %v203, %v206
    %vm208 = vweird.f32 %v202
    %vm209 = vweird.f32 %v203
    %vm210 = vmor %vm208, %vm209
    %v211 = vsel %vm210, %v203, %v207
    %v212 = vand.u32 2147483647, %v202
    %vm213 = vcmp.eq.f32.partialorder %v212, 8.507059e+37
    %v214 = vand.u32 %v202, 2147483648
    %v215 = vor.u32 1.1754944e-38, %v214
    %v216 = vsel %vm213, %v215, %v211
    %v217 = vmul.f32 1.0, %v216
    %219 = vrot.lane.b32.xlu0 %v196, 64
    %v220 = vpop.permute.xlu0 %219
    %v222 = vmul.f32 %v217, %v220
    %224 = vrot.lane.b32.xlu0 %v222, 64
    %v225 = vpop.permute.xlu0 %224
    %v227 = vadd.f32 %v142, %v225
    %v228 = vtanh.pop %v227
    %v229 = vsub.f32 1.0, %v217
    %231 = vrot.lane.b32.xlu0 %v228, 96
    %v232 = vpop.permute.xlu0 %231
    %v234 = vmul.f32 %v229, %v232
    %v235 = vmul.f32 %v217, 0.0
    %v236 = vadd.f32 %v234, %v235
    %238 = vrot.lane.b32.xlu0 %v236, 96
    %v239 = vpop.permute.xlu0 %238
    %v241 = vsel %vm174, %v239, 0.0
    %v242 = vld [vmem:[%s5] sm:$0xff]
    %v243 = vld [vmem:[%s5 + $0x8] sm:$0xff]
    %v244 = vld [vmem:[%s5 + $0x10] sm:$0xff]
    %v245 = vld [vmem:[%s5 + $0x18] sm:$0xff]
    %v246 = vld [vmem:[%s5 + $0x20] sm:$0xff]
    %v247 = vld [vmem:[%s5 + $0x28] sm:$0xff]
    %v248 = vld [vmem:[%s5 + $0x30] sm:$0xff]
    %v249 = vld [vmem:[%s5 + $0x38] sm:$0xff]
    %v251 = vperm.slane %v166, 0
    %vm253 = vcmask 523264
    %v255 = vsel %vm253, %v241, 0
    %257 = vmatpush.msra.mxu0 0.0
    %258 = vmatpush.msra.mxu0 0.0
    %259 = vmatpush.msra.mxu0 0.0
    %260 = vmatpush.msra.mxu0 0.0
    %261 = vmatpush.msra.mxu0 0.0
    %262 = vmatpush.msra.mxu0 0.0
    %263 = vmatpush.msra.mxu0 0.0
    %264 = vmatpush.msra.mxu0 0.0
    %265 = vmatpush.msra.mxu0 %v249
    %266 = vmatpush.msra.mxu0 %v248
    %267 = vmatpush.msra.mxu0 %v247
    %268 = vmatpush.msra.mxu0 %v246
    %269 = vmatpush.msra.mxu0 %v245
    %270 = vmatpush.msra.mxu0 %v244
    %271 = vmatpush.msra.mxu0 %v243
    %272 = vmatpush.msra.mxu0 %v242
    %273 = vmatmul.f32.gmra.mxu0 %v255
    %v274 = vpop.f32.mrf.mxu0
    %v275 = vadd.f32 %v251, %v274
    %276 = vdwg.mxu0
    %v277 = vxor.u32 %v275, 2147483648
    %v278 = vmul.f32 %v277, 1.442695
    %v279 = vpow.pop %v278
    %v280 = vadd.f32 %v279, 1.0
    %v281 = vrcp.pop %v280
    %v282 = vmul.f32 %v280, %v281
    %v283 = vsub.f32 1.0, %v282
    %v284 = vmul.f32 %v281, %v283
    %v285 = vadd.f32 %v281, %v284
    %vm286 = vweird.f32 %v280
    %vm287 = vweird.f32 %v281
    %vm288 = vmor %vm286, %vm287
    %v289 = vsel %vm288, %v281, %v285
    %v290 = vand.u32 2147483647, %v280
    %vm291 = vcmp.eq.f32.partialorder %v290, 8.507059e+37
    %v292 = vand.u32 %v280, 2147483648
    %v293 = vor.u32 1.1754944e-38, %v292
    %v294 = vsel %vm291, %v293, %v289
    %v295 = vmul.f32 1.0, %v294
    %297 = vrot.lane.b32.xlu0 %v275, 32
    %v298 = vpop.permute.xlu0 %297
    %v300 = vmul.f32 %v295, %v298
    %302 = vrot.lane.b32.xlu0 %v300, 64
    %v303 = vpop.permute.xlu0 %302
    %v305 = vadd.f32 %v275, %v303
    %v306 = vtanh.pop %v305
    %v307 = vsub.f32 1.0, %v295
    %309 = vrot.lane.b32.xlu0 %v306, 96
    %v310 = vpop.permute.xlu0 %309
    %v312 = vmul.f32 %v307, %v310
    %v313 = vmul.f32 %v295, 0.0
    %v314 = vadd.f32 %v312, %v313
    %v315 = vsel %vm174, %v239, 0
    %317 = vmatpush.msra.mxu0 0.0
    %318 = vmatpush.msra.mxu0 0.0
    %319 = vmatpush.msra.mxu0 0.0
    %320 = vmatpush.msra.mxu0 0.0
    %321 = vmatpush.msra.mxu0 0.0
    %322 = vmatpush.msra.mxu0 0.0
    %323 = vmatpush.msra.mxu0 0.0
    %324 = vmatpush.msra.mxu0 0.0
    %325 = vmatpush.msra.mxu0 0.0
    %326 = vmatpush.msra.mxu0 0.0
    %327 = vmatpush.msra.mxu0 0.0
    %328 = vmatpush.msra.mxu0 0.0
    %329 = vmatpush.msra.mxu0 %v170
    %330 = vmatpush.msra.mxu0 %v169
    %331 = vmatpush.msra.mxu0 %v168
    %332 = vmatpush.msra.mxu0 %v167
    %333 = vmatmul.f32.gmra.mxu0 %v315
    %v334 = vpop.f32.mrf.mxu0
    %v335 = vadd.f32 %v172, %v334
    %336 = vdwg.mxu0
    %v337 = vadd.f32 %v145, %v335
    %v338 = vxor.u32 %v337, 2147483648
    %v339 = vmul.f32 %v338, 1.442695
    %v340 = vpow.pop %v339
    %v341 = vadd.f32 %v340, 1.0
    %v342 = vrcp.pop %v341
    %v343 = vmul.f32 %v341, %v342
    %v344 = vsub.f32 1.0, %v343
    %v345 = vmul.f32 %v342, %v344
    %v346 = vadd.f32 %v342, %v345
    %vm347 = vweird.f32 %v341
    %vm348 = vweird.f32 %v342
    %vm349 = vmor %vm347, %vm348
    %v350 = vsel %vm349, %v342, %v346
    %v351 = vand.u32 2147483647, %v341
    %vm352 = vcmp.eq.f32.partialorder %v351, 8.507059e+37
    %v353 = vand.u32 %v341, 2147483648
    %v354 = vor.u32 1.1754944e-38, %v353
    %v355 = vsel %vm352, %v354, %v350
    %v356 = vmul.f32 1.0, %v355
    %358 = vrot.lane.b32.xlu0 %v335, 64
    %v359 = vpop.permute.xlu0 %358
    %v361 = vmul.f32 %v356, %v359
    %363 = vrot.lane.b32.xlu0 %v361, 64
    %v364 = vpop.permute.xlu0 %363
    %v366 = vadd.f32 %v145, %v364
    %v367 = vtanh.pop %v366
    %v368 = vsub.f32 1.0, %v356
    %370 = vrot.lane.b32.xlu0 %v367, 96
    %v371 = vpop.permute.xlu0 %370
    %v373 = vmul.f32 %v368, %v371
    %v374 = vmul.f32 %v356, %v236
    %v375 = vadd.f32 %v373, %v374
    %377 = vrot.lane.b32.xlu0 %v375, 96
    %v378 = vpop.permute.xlu0 %377
    %v380 = vsel %vm174, %v378, %v314
    %v382 = vsel %vm253, %v380, 0
    %384 = vmatpush.msra.mxu0 0.0
    %385 = vmatpush.msra.mxu0 0.0
    %386 = vmatpush.msra.mxu0 0.0
    %387 = vmatpush.msra.mxu0 0.0
    %388 = vmatpush.msra.mxu0 0.0
    %389 = vmatpush.msra.mxu0 0.0
    %390 = vmatpush.msra.mxu0 0.0
    %391 = vmatpush.msra.mxu0 0.0
    %392 = vmatpush.msra.mxu0 %v249
    %393 = vmatpush.msra.mxu0 %v248
    %394 = vmatpush.msra.mxu0 %v247
    %395 = vmatpush.msra.mxu0 %v246
    %396 = vmatpush.msra.mxu0 %v245
    %397 = vmatpush.msra.mxu0 %v244
    %398 = vmatpush.msra.mxu0 %v243
    %399 = vmatpush.msra.mxu0 %v242
    %400 = vmatmul.f32.gmra.mxu0 %v382
    %v401 = vpop.f32.mrf.mxu0
    %v402 = vadd.f32 %v251, %v401
    %403 = vdwg.mxu0
    %v404 = vxor.u32 %v402, 2147483648
    %v405 = vmul.f32 %v404, 1.442695
    %v406 = vpow.pop %v405
    %v407 = vadd.f32 %v406, 1.0
    %v408 = vrcp.pop %v407
    %v409 = vmul.f32 %v407, %v408
    %v410 = vsub.f32 1.0, %v409
    %v411 = vmul.f32 %v408, %v410
    %v412 = vadd.f32 %v408, %v411
    %vm413 = vweird.f32 %v407
    %vm414 = vweird.f32 %v408
    %vm415 = vmor %vm413, %vm414
    %v416 = vsel %vm415, %v408, %v412
    %v417 = vand.u32 2147483647, %v407
    %vm418 = vcmp.eq.f32.partialorder %v417, 8.507059e+37
    %v419 = vand.u32 %v407, 2147483648
    %v420 = vor.u32 1.1754944e-38, %v419
    %v421 = vsel %vm418, %v420, %v416
    %v422 = vmul.f32 1.0, %v421
    %424 = vrot.lane.b32.xlu0 %v402, 32
    %v425 = vpop.permute.xlu0 %424
    %v427 = vmul.f32 %v422, %v425
    %429 = vrot.lane.b32.xlu0 %v427, 64
    %v430 = vpop.permute.xlu0 %429
    %v432 = vadd.f32 %v402, %v430
    %v433 = vtanh.pop %v432
    %v434 = vsub.f32 1.0, %v422
    %436 = vrot.lane.b32.xlu0 %v433, 96
    %v437 = vpop.permute.xlu0 %436
    %v439 = vmul.f32 %v434, %v437
    %v440 = vmul.f32 %v422, %v314
    %v441 = vadd.f32 %v439, %v440
    %v442 = vsel %vm174, %v378, 0
    %444 = vmatpush.msra.mxu0 0.0
    %445 = vmatpush.msra.mxu0 0.0
    %446 = vmatpush.msra.mxu0 0.0
    %447 = vmatpush.msra.mxu0 0.0
    %448 = vmatpush.msra.mxu0 0.0
    %449 = vmatpush.msra.mxu0 0.0
    %450 = vmatpush.msra.mxu0 0.0
    %451 = vmatpush.msra.mxu0 0.0
    %452 = vmatpush.msra.mxu0 0.0
    %453 = vmatpush.msra.mxu0 0.0
    %454 = vmatpush.msra.mxu0 0.0
    %455 = vmatpush.msra.mxu0 0.0
    %456 = vmatpush.msra.mxu0 %v170
    %457 = vmatpush.msra.mxu0 %v169
    %458 = vmatpush.msra.mxu0 %v168
    %459 = vmatpush.msra.mxu0 %v167
    %460 = vmatmul.f32.gmra.mxu0 %v442
    %v461 = vpop.f32.mrf.mxu0
    %v462 = vadd.f32 %v172, %v461
    %463 = vdwg.mxu0
    %v464 = vadd.f32 %v148, %v462
    %v465 = vxor.u32 %v464, 2147483648
    %v466 = vmul.f32 %v465, 1.442695
    %v467 = vpow.pop %v466
    %v468 = vadd.f32 %v467, 1.0
    %v469 = vrcp.pop %v468
    %v470 = vmul.f32 %v468, %v469
    %v471 = vsub.f32 1.0, %v470
    %v472 = vmul.f32 %v469, %v471
    %v473 = vadd.f32 %v469, %v472
    %vm474 = vweird.f32 %v468
    %vm475 = vweird.f32 %v469
    %vm476 = vmor %vm474, %vm475
    %v477 = vsel %vm476, %v469, %v473
    %v478 = vand.u32 2147483647, %v468
    %vm479 = vcmp.eq.f32.partialorder %v478, 8.507059e+37
    %v480 = vand.u32 %v468, 2147483648
    %v481 = vor.u32 1.1754944e-38, %v480
    %v482 = vsel %vm479, %v481, %v477
    %v483 = vmul.f32 1.0, %v482
    %485 = vrot.lane.b32.xlu0 %v462, 64
    %v486 = vpop.permute.xlu0 %485
    %v488 = vmul.f32 %v483, %v486
    %490 = vrot.lane.b32.xlu0 %v488, 64
    %v491 = vpop.permute.xlu0 %490
    %v493 = vadd.f32 %v148, %v491
    %v494 = vtanh.pop %v493
    %v495 = vsub.f32 1.0, %v483
    %497 = vrot.lane.b32.xlu0 %v494, 96
    %v498 = vpop.permute.xlu0 %497
    %v500 = vmul.f32 %v495, %v498
    %v501 = vmul.f32 %v483, %v375
    %v502 = vadd.f32 %v500, %v501
    %504 = vrot.lane.b32.xlu0 %v502, 96
    %v505 = vpop.permute.xlu0 %504
    %v507 = vsel %vm174, %v505, %v441
    %v509 = vsel %vm253, %v507, 0
    %511 = vmatpush.msra.mxu0 0.0
    %512 = vmatpush.msra.mxu0 0.0
    %513 = vmatpush.msra.mxu0 0.0
    %514 = vmatpush.msra.mxu0 0.0
    %515 = vmatpush.msra.mxu0 0.0
    %516 = vmatpush.msra.mxu0 0.0
    %517 = vmatpush.msra.mxu0 0.0
    %518 = vmatpush.msra.mxu0 0.0
    %519 = vmatpush.msra.mxu0 %v249
    %520 = vmatpush.msra.mxu0 %v248
    %521 = vmatpush.msra.mxu0 %v247
    %522 = vmatpush.msra.mxu0 %v246
    %523 = vmatpush.msra.mxu0 %v245
    %524 = vmatpush.msra.mxu0 %v244
    %525 = vmatpush.msra.mxu0 %v243
    %526 = vmatpush.msra.mxu0 %v242
    %527 = vmatmul.f32.gmra.mxu0 %v509
    %v528 = vpop.f32.mrf.mxu0
    %v529 = vadd.f32 %v251, %v528
    %530 = vdwg.mxu0
    %v531 = vxor.u32 %v529, 2147483648
    %v532 = vmul.f32 %v531, 1.442695
    %v533 = vpow.pop %v532
    %v534 = vadd.f32 %v533, 1.0
    %v535 = vrcp.pop %v534
    %v536 = vmul.f32 %v534, %v535
    %v537 = vsub.f32 1.0, %v536
    %v538 = vmul.f32 %v535, %v537
    %v539 = vadd.f32 %v535, %v538
    %vm540 = vweird.f32 %v534
    %vm541 = vweird.f32 %v535
    %vm542 = vmor %vm540, %vm541
    %v543 = vsel %vm542, %v535, %v539
    %v544 = vand.u32 2147483647, %v534
    %vm545 = vcmp.eq.f32.partialorder %v544, 8.507059e+37
    %v546 = vand.u32 %v534, 2147483648
    %v547 = vor.u32 1.1754944e-38, %v546
    %v548 = vsel %vm545, %v547, %v543
    %v549 = vmul.f32 1.0, %v548
    %551 = vrot.lane.b32.xlu0 %v529, 32
    %v552 = vpop.permute.xlu0 %551
    %v554 = vmul.f32 %v549, %v552
    %556 = vrot.lane.b32.xlu0 %v554, 64
    %v557 = vpop.permute.xlu0 %556
    %v559 = vadd.f32 %v529, %v557
    %v560 = vtanh.pop %v559
    %v561 = vsub.f32 1.0, %v549
    %563 = vrot.lane.b32.xlu0 %v560, 96
    %v564 = vpop.permute.xlu0 %563
    %v566 = vmul.f32 %v561, %v564
    %v567 = vmul.f32 %v549, %v441
    %v568 = vadd.f32 %v566, %v567
    %v569 = vsel %vm174, %v505, 0
    %571 = vmatpush.msra.mxu0 0.0
    %572 = vmatpush.msra.mxu0 0.0
    %573 = vmatpush.msra.mxu0 0.0
    %574 = vmatpush.msra.mxu0 0.0
    %575 = vmatpush.msra.mxu0 0.0
    %576 = vmatpush.msra.mxu0 0.0
    %577 = vmatpush.msra.mxu0 0.0
    %578 = vmatpush.msra.mxu0 0.0
    %579 = vmatpush.msra.mxu0 0.0
    %580 = vmatpush.msra.mxu0 0.0
    %581 = vmatpush.msra.mxu0 0.0
    %582 = vmatpush.msra.mxu0 0.0
    %583 = vmatpush.msra.mxu0 %v170
    %584 = vmatpush.msra.mxu0 %v169
    %585 = vmatpush.msra.mxu0 %v168
    %586 = vmatpush.msra.mxu0 %v167
    %587 = vmatmul.f32.gmra.mxu0 %v569
    %v588 = vpop.f32.mrf.mxu0
    %v589 = vadd.f32 %v172, %v588
    %590 = vdwg.mxu0
    %v591 = vadd.f32 %v151, %v589
    %v592 = vxor.u32 %v591, 2147483648
    %v593 = vmul.f32 %v592, 1.442695
    %v594 = vpow.pop %v593
    %v595 = vadd.f32 %v594, 1.0
    %v596 = vrcp.pop %v595
    %v597 = vmul.f32 %v595, %v596
    %v598 = vsub.f32 1.0, %v597
    %v599 = vmul.f32 %v596, %v598
    %v600 = vadd.f32 %v596, %v599
    %vm601 = vweird.f32 %v595
    %vm602 = vweird.f32 %v596
    %vm603 = vmor %vm601, %vm602
    %v604 = vsel %vm603, %v596, %v600
    %v605 = vand.u32 2147483647, %v595
    %vm606 = vcmp.eq.f32.partialorder %v605, 8.507059e+37
    %v607 = vand.u32 %v595, 2147483648
    %v608 = vor.u32 1.1754944e-38, %v607
    %v609 = vsel %vm606, %v608, %v604
    %v610 = vmul.f32 1.0, %v609
    %612 = vrot.lane.b32.xlu0 %v589, 64
    %v613 = vpop.permute.xlu0 %612
    %v615 = vmul.f32 %v610, %v613
    %617 = vrot.lane.b32.xlu0 %v615, 64
    %v618 = vpop.permute.xlu0 %617
    %v620 = vadd.f32 %v151, %v618
    %v621 = vtanh.pop %v620
    %v622 = vsub.f32 1.0, %v610
    %624 = vrot.lane.b32.xlu0 %v621, 96
    %v625 = vpop.permute.xlu0 %624
    %v627 = vmul.f32 %v622, %v625
    %v628 = vmul.f32 %v610, %v502
    %v629 = vadd.f32 %v627, %v628
    %631 = vrot.lane.b32.xlu0 %v629, 96
    %v632 = vpop.permute.xlu0 %631
    %v634 = vsel %vm174, %v632, %v568
    %v636 = vsel %vm253, %v634, 0
    %638 = vmatpush.msra.mxu0 0.0
    %639 = vmatpush.msra.mxu0 0.0
    %640 = vmatpush.msra.mxu0 0.0
    %641 = vmatpush.msra.mxu0 0.0
    %642 = vmatpush.msra.mxu0 0.0
    %643 = vmatpush.msra.mxu0 0.0
    %644 = vmatpush.msra.mxu0 0.0
    %645 = vmatpush.msra.mxu0 0.0
    %646 = vmatpush.msra.mxu0 %v249
    %647 = vmatpush.msra.mxu0 %v248
    %648 = vmatpush.msra.mxu0 %v247
    %649 = vmatpush.msra.mxu0 %v246
    %650 = vmatpush.msra.mxu0 %v245
    %651 = vmatpush.msra.mxu0 %v244
    %652 = vmatpush.msra.mxu0 %v243
    %653 = vmatpush.msra.mxu0 %v242
    %654 = vmatmul.f32.gmra.mxu0 %v636
    %v655 = vpop.f32.mrf.mxu0
    %v656 = vadd.f32 %v251, %v655
    %657 = vdwg.mxu0
    %v658 = vxor.u32 %v656, 2147483648
    %v659 = vmul.f32 %v658, 1.442695
    %v660 = vpow.pop %v659
    %v661 = vadd.f32 %v660, 1.0
    %v662 = vrcp.pop %v661
    %v663 = vmul.f32 %v661, %v662
    %v664 = vsub.f32 1.0, %v663
    %v665 = vmul.f32 %v662, %v664
    %v666 = vadd.f32 %v662, %v665
    %vm667 = vweird.f32 %v661
    %vm668 = vweird.f32 %v662
    %vm669 = vmor %vm667, %vm668
    %v670 = vsel %vm669, %v662, %v666
    %v671 = vand.u32 2147483647, %v661
    %vm672 = vcmp.eq.f32.partialorder %v671, 8.507059e+37
    %v673 = vand.u32 %v661, 2147483648
    %v674 = vor.u32 1.1754944e-38, %v673
    %v675 = vsel %vm672, %v674, %v670
    %v676 = vmul.f32 1.0, %v675
    %678 = vrot.lane.b32.xlu0 %v656, 32
    %v679 = vpop.permute.xlu0 %678
    %v681 = vmul.f32 %v676, %v679
    %683 = vrot.lane.b32.xlu0 %v681, 64
    %v684 = vpop.permute.xlu0 %683
    %v686 = vadd.f32 %v656, %v684
    %v687 = vtanh.pop %v686
    %v688 = vsub.f32 1.0, %v676
    %690 = vrot.lane.b32.xlu0 %v687, 96
    %v691 = vpop.permute.xlu0 %690
    %v693 = vmul.f32 %v688, %v691
    %v694 = vmul.f32 %v676, %v568
    %v695 = vadd.f32 %v693, %v694
    %v696 = vsel %vm174, %v632, 0
    %698 = vmatpush.msra.mxu0 0.0
    %699 = vmatpush.msra.mxu0 0.0
    %700 = vmatpush.msra.mxu0 0.0
    %701 = vmatpush.msra.mxu0 0.0
    %702 = vmatpush.msra.mxu0 0.0
    %703 = vmatpush.msra.mxu0 0.0
    %704 = vmatpush.msra.mxu0 0.0
    %705 = vmatpush.msra.mxu0 0.0
    %706 = vmatpush.msra.mxu0 0.0
    %707 = vmatpush.msra.mxu0 0.0
    %708 = vmatpush.msra.mxu0 0.0
    %709 = vmatpush.msra.mxu0 0.0
    %710 = vmatpush.msra.mxu0 %v170
    %711 = vmatpush.msra.mxu0 %v169
    %712 = vmatpush.msra.mxu0 %v168
    %713 = vmatpush.msra.mxu0 %v167
    %714 = vmatmul.f32.gmra.mxu0 %v696
    %v715 = vpop.f32.mrf.mxu0
    %v716 = vadd.f32 %v172, %v715
    %717 = vdwg.mxu0
    %v718 = vadd.f32 %v154, %v716
    %v719 = vxor.u32 %v718, 2147483648
    %v720 = vmul.f32 %v719, 1.442695
    %v721 = vpow.pop %v720
    %v722 = vadd.f32 %v721, 1.0
    %v723 = vrcp.pop %v722
    %v724 = vmul.f32 %v722, %v723
    %v725 = vsub.f32 1.0, %v724
    %v726 = vmul.f32 %v723, %v725
    %v727 = vadd.f32 %v723, %v726
    %vm728 = vweird.f32 %v722
    %vm729 = vweird.f32 %v723
    %vm730 = vmor %vm728, %vm729
    %v731 = vsel %vm730, %v723, %v727
    %v732 = vand.u32 2147483647, %v722
    %vm733 = vcmp.eq.f32.partialorder %v732, 8.507059e+37
    %v734 = vand.u32 %v722, 2147483648
    %v735 = vor.u32 1.1754944e-38, %v734
    %v736 = vsel %vm733, %v735, %v731
    %v737 = vmul.f32 1.0, %v736
    %739 = vrot.lane.b32.xlu0 %v716, 64
    %v740 = vpop.permute.xlu0 %739
    %v742 = vmul.f32 %v737, %v740
    %744 = vrot.lane.b32.xlu0 %v742, 64
    %v745 = vpop.permute.xlu0 %744
    %v747 = vadd.f32 %v154, %v745
    %v748 = vtanh.pop %v747
    %v749 = vsub.f32 1.0, %v737
    %751 = vrot.lane.b32.xlu0 %v748, 96
    %v752 = vpop.permute.xlu0 %751
    %v754 = vmul.f32 %v749, %v752
    %v755 = vmul.f32 %v737, %v629
    %v756 = vadd.f32 %v754, %v755
    %758 = vrot.lane.b32.xlu0 %v756, 96
    %v759 = vpop.permute.xlu0 %758
    %v761 = vsel %vm174, %v759, %v695
    %v763 = vsel %vm253, %v761, 0
    %765 = vmatpush.msra.mxu0 0.0
    %766 = vmatpush.msra.mxu0 0.0
    %767 = vmatpush.msra.mxu0 0.0
    %768 = vmatpush.msra.mxu0 0.0
    %769 = vmatpush.msra.mxu0 0.0
    %770 = vmatpush.msra.mxu0 0.0
    %771 = vmatpush.msra.mxu0 0.0
    %772 = vmatpush.msra.mxu0 0.0
    %773 = vmatpush.msra.mxu0 %v249
    %774 = vmatpush.msra.mxu0 %v248
    %775 = vmatpush.msra.mxu0 %v247
    %776 = vmatpush.msra.mxu0 %v246
    %777 = vmatpush.msra.mxu0 %v245
    %778 = vmatpush.msra.mxu0 %v244
    %779 = vmatpush.msra.mxu0 %v243
    %780 = vmatpush.msra.mxu0 %v242
    %781 = vmatmul.f32.gmra.mxu0 %v763
    %v782 = vpop.f32.mrf.mxu0
    %v783 = vadd.f32 %v251, %v782
    %784 = vdwg.mxu0
    %v785 = vxor.u32 %v783, 2147483648
    %v786 = vmul.f32 %v785, 1.442695
    %v787 = vpow.pop %v786
    %v788 = vadd.f32 %v787, 1.0
    %v789 = vrcp.pop %v788
    %v790 = vmul.f32 %v788, %v789
    %v791 = vsub.f32 1.0, %v790
    %v792 = vmul.f32 %v789, %v791
    %v793 = vadd.f32 %v789, %v792
    %vm794 = vweird.f32 %v788
    %vm795 = vweird.f32 %v789
    %vm796 = vmor %vm794, %vm795
    %v797 = vsel %vm796, %v789, %v793
    %v798 = vand.u32 2147483647, %v788
    %vm799 = vcmp.eq.f32.partialorder %v798, 8.507059e+37
    %v800 = vand.u32 %v788, 2147483648
    %v801 = vor.u32 1.1754944e-38, %v800
    %v802 = vsel %vm799, %v801, %v797
    %v803 = vmul.f32 1.0, %v802
    %805 = vrot.lane.b32.xlu0 %v783, 32
    %v806 = vpop.permute.xlu0 %805
    %v808 = vmul.f32 %v803, %v806
    %810 = vrot.lane.b32.xlu0 %v808, 64
    %v811 = vpop.permute.xlu0 %810
    %v813 = vadd.f32 %v783, %v811
    %v814 = vtanh.pop %v813
    %v815 = vsub.f32 1.0, %v803
    %817 = vrot.lane.b32.xlu0 %v814, 96
    %v818 = vpop.permute.xlu0 %817
    %v820 = vmul.f32 %v815, %v818
    %v821 = vmul.f32 %v803, %v695
    %v822 = vadd.f32 %v820, %v821
    %v823 = vsel %vm174, %v759, 0
    %825 = vmatpush.msra.mxu0 0.0
    %826 = vmatpush.msra.mxu0 0.0
    %827 = vmatpush.msra.mxu0 0.0
    %828 = vmatpush.msra.mxu0 0.0
    %829 = vmatpush.msra.mxu0 0.0
    %830 = vmatpush.msra.mxu0 0.0
    %831 = vmatpush.msra.mxu0 0.0
    %832 = vmatpush.msra.mxu0 0.0
    %833 = vmatpush.msra.mxu0 0.0
    %834 = vmatpush.msra.mxu0 0.0
    %835 = vmatpush.msra.mxu0 0.0
    %836 = vmatpush.msra.mxu0 0.0
    %837 = vmatpush.msra.mxu0 %v170
    %838 = vmatpush.msra.mxu0 %v169
    %839 = vmatpush.msra.mxu0 %v168
    %840 = vmatpush.msra.mxu0 %v167
    %841 = vmatmul.f32.gmra.mxu0 %v823
    %v842 = vpop.f32.mrf.mxu0
    %v843 = vadd.f32 %v172, %v842
    %844 = vdwg.mxu0
    %v845 = vadd.f32 %v157, %v843
    %v846 = vxor.u32 %v845, 2147483648
    %v847 = vmul.f32 %v846, 1.442695
    %v848 = vpow.pop %v847
    %v849 = vadd.f32 %v848, 1.0
    %v850 = vrcp.pop %v849
    %v851 = vmul.f32 %v849, %v850
    %v852 = vsub.f32 1.0, %v851
    %v853 = vmul.f32 %v850, %v852
    %v854 = vadd.f32 %v850, %v853
    %vm855 = vweird.f32 %v849
    %vm856 = vweird.f32 %v850
    %vm857 = vmor %vm855, %vm856
    %v858 = vsel %vm857, %v850, %v854
    %v859 = vand.u32 2147483647, %v849
    %vm860 = vcmp.eq.f32.partialorder %v859, 8.507059e+37
    %v861 = vand.u32 %v849, 2147483648
    %v862 = vor.u32 1.1754944e-38, %v861
    %v863 = vsel %vm860, %v862, %v858
    %v864 = vmul.f32 1.0, %v863
    %866 = vrot.lane.b32.xlu0 %v843, 64
    %v867 = vpop.permute.xlu0 %866
    %v869 = vmul.f32 %v864, %v867
    %871 = vrot.lane.b32.xlu0 %v869, 64
    %v872 = vpop.permute.xlu0 %871
    %v874 = vadd.f32 %v157, %v872
    %v875 = vtanh.pop %v874
    %v876 = vsub.f32 1.0, %v864
    %878 = vrot.lane.b32.xlu0 %v875, 96
    %v879 = vpop.permute.xlu0 %878
    %v881 = vmul.f32 %v876, %v879
    %v882 = vmul.f32 %v864, %v756
    %v883 = vadd.f32 %v881, %v882
    %885 = vrot.lane.b32.xlu0 %v883, 96
    %v886 = vpop.permute.xlu0 %885
    %v888 = vsel %vm174, %v886, %v822
    %v890 = vsel %vm253, %v888, 0
    %892 = vmatpush.msra.mxu0 0.0
    %893 = vmatpush.msra.mxu0 0.0
    %894 = vmatpush.msra.mxu0 0.0
    %895 = vmatpush.msra.mxu0 0.0
    %896 = vmatpush.msra.mxu0 0.0
    %897 = vmatpush.msra.mxu0 0.0
    %898 = vmatpush.msra.mxu0 0.0
    %899 = vmatpush.msra.mxu0 0.0
    %900 = vmatpush.msra.mxu0 %v249
    %901 = vmatpush.msra.mxu0 %v248
    %902 = vmatpush.msra.mxu0 %v247
    %903 = vmatpush.msra.mxu0 %v246
    %904 = vmatpush.msra.mxu0 %v245
    %905 = vmatpush.msra.mxu0 %v244
    %906 = vmatpush.msra.mxu0 %v243
    %907 = vmatpush.msra.mxu0 %v242
    %908 = vmatmul.f32.gmra.mxu0 %v890
    %v909 = vpop.f32.mrf.mxu0
    %v910 = vadd.f32 %v251, %v909
    %911 = vdwg.mxu0
    %v912 = vxor.u32 %v910, 2147483648
    %v913 = vmul.f32 %v912, 1.442695
    %v914 = vpow.pop %v913
    %v915 = vadd.f32 %v914, 1.0
    %v916 = vrcp.pop %v915
    %v917 = vmul.f32 %v915, %v916
    %v918 = vsub.f32 1.0, %v917
    %v919 = vmul.f32 %v916, %v918
    %v920 = vadd.f32 %v916, %v919
    %vm921 = vweird.f32 %v915
    %vm922 = vweird.f32 %v916
    %vm923 = vmor %vm921, %vm922
    %v924 = vsel %vm923, %v916, %v920
    %v925 = vand.u32 2147483647, %v915
    %vm926 = vcmp.eq.f32.partialorder %v925, 8.507059e+37
    %v927 = vand.u32 %v915, 2147483648
    %v928 = vor.u32 1.1754944e-38, %v927
    %v929 = vsel %vm926, %v928, %v924
    %v930 = vmul.f32 1.0, %v929
    %932 = vrot.lane.b32.xlu0 %v910, 32
    %v933 = vpop.permute.xlu0 %932
    %v935 = vmul.f32 %v930, %v933
    %937 = vrot.lane.b32.xlu0 %v935, 64
    %v938 = vpop.permute.xlu0 %937
    %v940 = vadd.f32 %v910, %v938
    %v941 = vtanh.pop %v940
    %v942 = vsub.f32 1.0, %v930
    %944 = vrot.lane.b32.xlu0 %v941, 96
    %v945 = vpop.permute.xlu0 %944
    %v947 = vmul.f32 %v942, %v945
    %v948 = vmul.f32 %v930, %v822
    %v949 = vadd.f32 %v947, %v948
    %v950 = vsel %vm174, %v886, 0
    %952 = vmatpush.msra.mxu0 0.0
    %953 = vmatpush.msra.mxu0 0.0
    %954 = vmatpush.msra.mxu0 0.0
    %955 = vmatpush.msra.mxu0 0.0
    %956 = vmatpush.msra.mxu0 0.0
    %957 = vmatpush.msra.mxu0 0.0
    %958 = vmatpush.msra.mxu0 0.0
    %959 = vmatpush.msra.mxu0 0.0
    %960 = vmatpush.msra.mxu0 0.0
    %961 = vmatpush.msra.mxu0 0.0
    %962 = vmatpush.msra.mxu0 0.0
    %963 = vmatpush.msra.mxu0 0.0
    %964 = vmatpush.msra.mxu0 %v170
    %965 = vmatpush.msra.mxu0 %v169
    %966 = vmatpush.msra.mxu0 %v168
    %967 = vmatpush.msra.mxu0 %v167
    %968 = vmatmul.f32.gmra.mxu0 %v950
    %v969 = vpop.f32.mrf.mxu0
    %v970 = vadd.f32 %v172, %v969
    %971 = vdwg.mxu0
    %v972 = vadd.f32 %v160, %v970
    %v973 = vxor.u32 %v972, 2147483648
    %v974 = vmul.f32 %v973, 1.442695
    %v975 = vpow.pop %v974
    %v976 = vadd.f32 %v975, 1.0
    %v977 = vrcp.pop %v976
    %v978 = vmul.f32 %v976, %v977
    %v979 = vsub.f32 1.0, %v978
    %v980 = vmul.f32 %v977, %v979
    %v981 = vadd.f32 %v977, %v980
    %vm982 = vweird.f32 %v976
    %vm983 = vweird.f32 %v977
    %vm984 = vmor %vm982, %vm983
    %v985 = vsel %vm984, %v977, %v981
    %v986 = vand.u32 2147483647, %v976
    %vm987 = vcmp.eq.f32.partialorder %v986, 8.507059e+37
    %v988 = vand.u32 %v976, 2147483648
    %v989 = vor.u32 1.1754944e-38, %v988
    %v990 = vsel %vm987, %v989, %v985
    %v991 = vmul.f32 1.0, %v990
    %993 = vrot.lane.b32.xlu0 %v970, 64
    %v994 = vpop.permute.xlu0 %993
    %v996 = vmul.f32 %v991, %v994
    %998 = vrot.lane.b32.xlu0 %v996, 64
    %v999 = vpop.permute.xlu0 %998
    %v1001 = vadd.f32 %v160, %v999
    %v1002 = vtanh.pop %v1001
    %v1003 = vsub.f32 1.0, %v991
    %1005 = vrot.lane.b32.xlu0 %v1002, 96
    %v1006 = vpop.permute.xlu0 %1005
    %v1008 = vmul.f32 %v1003, %v1006
    %v1009 = vmul.f32 %v991, %v883
    %v1010 = vadd.f32 %v1008, %v1009
    %1012 = vrot.lane.b32.xlu0 %v1010, 96
    %v1013 = vpop.permute.xlu0 %1012
    %v1015 = vsel %vm174, %v1013, %v949
    %v1017 = vsel %vm253, %v1015, 0
    %1019 = vmatpush.msra.mxu0 0.0
    %1020 = vmatpush.msra.mxu0 0.0
    %1021 = vmatpush.msra.mxu0 0.0
    %1022 = vmatpush.msra.mxu0 0.0
    %1023 = vmatpush.msra.mxu0 0.0
    %1024 = vmatpush.msra.mxu0 0.0
    %1025 = vmatpush.msra.mxu0 0.0
    %1026 = vmatpush.msra.mxu0 0.0
    %1027 = vmatpush.msra.mxu0 %v249
    %1028 = vmatpush.msra.mxu0 %v248
    %1029 = vmatpush.msra.mxu0 %v247
    %1030 = vmatpush.msra.mxu0 %v246
    %1031 = vmatpush.msra.mxu0 %v245
    %1032 = vmatpush.msra.mxu0 %v244
    %1033 = vmatpush.msra.mxu0 %v243
    %1034 = vmatpush.msra.mxu0 %v242
    %1035 = vmatmul.f32.gmra.mxu0 %v1017
    %v1036 = vpop.f32.mrf.mxu0
    %v1037 = vadd.f32 %v251, %v1036
    %1038 = vdwg.mxu0
    %v1039 = vxor.u32 %v1037, 2147483648
    %v1040 = vmul.f32 %v1039, 1.442695
    %v1041 = vpow.pop %v1040
    %v1042 = vadd.f32 %v1041, 1.0
    %v1043 = vrcp.pop %v1042
    %v1044 = vmul.f32 %v1042, %v1043
    %v1045 = vsub.f32 1.0, %v1044
    %v1046 = vmul.f32 %v1043, %v1045
    %v1047 = vadd.f32 %v1043, %v1046
    %vm1048 = vweird.f32 %v1042
    %vm1049 = vweird.f32 %v1043
    %vm1050 = vmor %vm1048, %vm1049
    %v1051 = vsel %vm1050, %v1043, %v1047
    %v1052 = vand.u32 2147483647, %v1042
    %vm1053 = vcmp.eq.f32.partialorder %v1052, 8.507059e+37
    %v1054 = vand.u32 %v1042, 2147483648
    %v1055 = vor.u32 1.1754944e-38, %v1054
    %v1056 = vsel %vm1053, %v1055, %v1051
    %v1057 = vmul.f32 1.0, %v1056
    %1059 = vrot.lane.b32.xlu0 %v1037, 32
    %v1060 = vpop.permute.xlu0 %1059
    %v1062 = vmul.f32 %v1057, %v1060
    %1064 = vrot.lane.b32.xlu0 %v1062, 64
    %v1065 = vpop.permute.xlu0 %1064
    %v1067 = vadd.f32 %v1037, %v1065
    %v1068 = vtanh.pop %v1067
    %v1069 = vsub.f32 1.0, %v1057
    %1071 = vrot.lane.b32.xlu0 %v1068, 96
    %v1072 = vpop.permute.xlu0 %1071
    %v1074 = vmul.f32 %v1069, %v1072
    %v1075 = vmul.f32 %v1057, %v949
    %v1076 = vadd.f32 %v1074, %v1075
    %v1077 = vsel %vm174, %v1013, 0
    %1079 = vmatpush.msra.mxu0 0.0
    %1080 = vmatpush.msra.mxu0 0.0
    %1081 = vmatpush.msra.mxu0 0.0
    %1082 = vmatpush.msra.mxu0 0.0
    %1083 = vmatpush.msra.mxu0 0.0
    %1084 = vmatpush.msra.mxu0 0.0
    %1085 = vmatpush.msra.mxu0 0.0
    %1086 = vmatpush.msra.mxu0 0.0
    %1087 = vmatpush.msra.mxu0 0.0
    %1088 = vmatpush.msra.mxu0 0.0
    %1089 = vmatpush.msra.mxu0 0.0
    %1090 = vmatpush.msra.mxu0 0.0
    %1091 = vmatpush.msra.mxu0 %v170
    %1092 = vmatpush.msra.mxu0 %v169
    %1093 = vmatpush.msra.mxu0 %v168
    %1094 = vmatpush.msra.mxu0 %v167
    %1095 = vmatmul.f32.gmra.mxu0 %v1077
    %v1096 = vpop.f32.mrf.mxu0
    %v1097 = vadd.f32 %v172, %v1096
    %1098 = vdwg.mxu0
    %v1099 = vadd.f32 %v163, %v1097
    %v1100 = vxor.u32 %v1099, 2147483648
    %v1101 = vmul.f32 %v1100, 1.442695
    %v1102 = vpow.pop %v1101
    %v1103 = vadd.f32 %v1102, 1.0
    %v1104 = vrcp.pop %v1103
    %v1105 = vmul.f32 %v1103, %v1104
    %v1106 = vsub.f32 1.0, %v1105
    %v1107 = vmul.f32 %v1104, %v1106
    %v1108 = vadd.f32 %v1104, %v1107
    %vm1109 = vweird.f32 %v1103
    %vm1110 = vweird.f32 %v1104
    %vm1111 = vmor %vm1109, %vm1110
    %v1112 = vsel %vm1111, %v1104, %v1108
    %v1113 = vand.u32 2147483647, %v1103
    %vm1114 = vcmp.eq.f32.partialorder %v1113, 8.507059e+37
    %v1115 = vand.u32 %v1103, 2147483648
    %v1116 = vor.u32 1.1754944e-38, %v1115
    %v1117 = vsel %vm1114, %v1116, %v1112
    %v1118 = vmul.f32 1.0, %v1117
    %1120 = vrot.lane.b32.xlu0 %v1097, 64
    %v1121 = vpop.permute.xlu0 %1120
    %v1123 = vmul.f32 %v1118, %v1121
    %1125 = vrot.lane.b32.xlu0 %v1123, 64
    %v1126 = vpop.permute.xlu0 %1125
    %v1128 = vadd.f32 %v163, %v1126
    %v1129 = vtanh.pop %v1128
    %v1130 = vsub.f32 1.0, %v1118
    %1132 = vrot.lane.b32.xlu0 %v1129, 96
    %v1133 = vpop.permute.xlu0 %1132
    %v1135 = vmul.f32 %v1130, %v1133
    %v1136 = vmul.f32 %v1118, %v1010
    %v1137 = vadd.f32 %v1135, %v1136
    %1139 = vrot.lane.b32.xlu0 %v1137, 96
    %v1140 = vpop.permute.xlu0 %1139
    %v1142 = vsel %vm174, %v1140, %v1076
    %v1144 = vsel %vm253, %v1142, 0
    %1146 = vmatpush.msra.mxu0 0.0
    %1147 = vmatpush.msra.mxu0 0.0
    %1148 = vmatpush.msra.mxu0 0.0
    %1149 = vmatpush.msra.mxu0 0.0
    %1150 = vmatpush.msra.mxu0 0.0
    %1151 = vmatpush.msra.mxu0 0.0
    %1152 = vmatpush.msra.mxu0 0.0
    %1153 = vmatpush.msra.mxu0 0.0
    %1154 = vmatpush.msra.mxu0 %v249
    %1155 = vmatpush.msra.mxu0 %v248
    %1156 = vmatpush.msra.mxu0 %v247
    %1157 = vmatpush.msra.mxu0 %v246
    %1158 = vmatpush.msra.mxu0 %v245
    %1159 = vmatpush.msra.mxu0 %v244
    %1160 = vmatpush.msra.mxu0 %v243
    %1161 = vmatpush.msra.mxu0 %v242
    %1162 = vmatmul.f32.gmra.mxu0 %v1144
    %v1163 = vpop.f32.mrf.mxu0
    %v1164 = vadd.f32 %v251, %v1163
    %1165 = vdwg.mxu0
    %v1166 = vxor.u32 %v1164, 2147483648
    %v1167 = vmul.f32 %v1166, 1.442695
    %v1168 = vpow.pop %v1167
    %v1169 = vadd.f32 %v1168, 1.0
    %v1170 = vrcp.pop %v1169
    %v1171 = vmul.f32 %v1169, %v1170
    %v1172 = vsub.f32 1.0, %v1171
    %v1173 = vmul.f32 %v1170, %v1172
    %v1174 = vadd.f32 %v1170, %v1173
    %vm1175 = vweird.f32 %v1169
    %vm1176 = vweird.f32 %v1170
    %vm1177 = vmor %vm1175, %vm1176
    %v1178 = vsel %vm1177, %v1170, %v1174
    %v1179 = vand.u32 2147483647, %v1169
    %vm1180 = vcmp.eq.f32.partialorder %v1179, 8.507059e+37
    %v1181 = vand.u32 %v1169, 2147483648
    %v1182 = vor.u32 1.1754944e-38, %v1181
    %v1183 = vsel %vm1180, %v1182, %v1178
    %v1184 = vmul.f32 1.0, %v1183
    %1186 = vrot.lane.b32.xlu0 %v1164, 32
    %v1187 = vpop.permute.xlu0 %1186
    %v1189 = vmul.f32 %v1184, %v1187
    %1191 = vrot.lane.b32.xlu0 %v1189, 64
    %v1192 = vpop.permute.xlu0 %1191
    %v1194 = vadd.f32 %v1164, %v1192
    %v1195 = vtanh.pop %v1194
    %v1196 = vsub.f32 1.0, %v1184
    %1198 = vrot.lane.b32.xlu0 %v1195, 96
    %v1199 = vpop.permute.xlu0 %1198
    %v1201 = vmul.f32 %v1196, %v1199
    %v1202 = vmul.f32 %v1184, %v1076
    %v1203 = vadd.f32 %v1201, %v1202
    %v1204 = vld [vmem:[#allocation6] sm:$0xff]
    %v1205 = vld [vmem:[#allocation6 + $0x8] sm:$0xff]
    %v1206 = vld [vmem:[#allocation6 + $0x10] sm:$0xff]
    %v1207 = vld [vmem:[#allocation6 + $0x18] sm:$0xff]
    %v1208 = vld [vmem:[%s8] sm:$0x1]
    %v1210 = vperm.slane %v1208, 0
    %1213 = vrot.lane.b32.xlu0 %v1203, 96
    %v1214 = vpop.permute.xlu0 %1213
    %v1215 = vsel %vm174, %v1214, 0
    %1217 = vmatpush.msra.mxu0 0.0
    %1218 = vmatpush.msra.mxu0 0.0
    %1219 = vmatpush.msra.mxu0 0.0
    %1220 = vmatpush.msra.mxu0 0.0
    %1221 = vmatpush.msra.mxu0 0.0
    %1222 = vmatpush.msra.mxu0 0.0
    %1223 = vmatpush.msra.mxu0 0.0
    %1224 = vmatpush.msra.mxu0 0.0
    %1225 = vmatpush.msra.mxu0 0.0
    %1226 = vmatpush.msra.mxu0 0.0
    %1227 = vmatpush.msra.mxu0 0.0
    %1228 = vmatpush.msra.mxu0 0.0
    %1229 = vmatpush.msra.mxu0 %v1207
    %1230 = vmatpush.msra.mxu0 %v1206
    %1231 = vmatpush.msra.mxu0 %v1205
    %1232 = vmatpush.msra.mxu0 %v1204
    %1233 = vmatmul.f32.gmra.mxu0 %v1215
    %v1234 = vpop.f32.mrf.mxu0
    %v1235 = vadd.f32 %v1210, %v1234
    %1236 = vdwg.mxu0
    %v1237 = vmax.f32 %v1235, 0.0
    %v1238 = vld [vmem:[%s9] sm:$0xff]
    %v1239 = vld [vmem:[%s9 + $0x8] sm:$0xff]
    %v1240 = vld [vmem:[%s9 + $0x10] sm:$0xff]
    %v1241 = vld [vmem:[%s9 + $0x18] sm:$0xff]
    %v1242 = vld [vmem:[%s9 + $0x20] sm:$0xff]
    %v1243 = vld [vmem:[%s9 + $0x28] sm:$0xff]
    %v1244 = vld [vmem:[%s9 + $0x30] sm:$0xff]
    %v1245 = vld [vmem:[%s9 + $0x38] sm:$0xff]
    %v1246 = vld [vmem:[%s10] sm:$0x1]
    %v1248 = vperm.slane %v1246, 0
    %v1251 = vsel %vm253, %v1237, 0
    %1253 = vmatpush.msra.mxu0 0.0
    %1254 = vmatpush.msra.mxu0 0.0
    %1255 = vmatpush.msra.mxu0 0.0
    %1256 = vmatpush.msra.mxu0 0.0
    %1257 = vmatpush.msra.mxu0 0.0
    %1258 = vmatpush.msra.mxu0 0.0
    %1259 = vmatpush.msra.mxu0 0.0
    %1260 = vmatpush.msra.mxu0 0.0
    %1261 = vmatpush.msra.mxu0 %v1245
    %1262 = vmatpush.msra.mxu0 %v1244
    %1263 = vmatpush.msra.mxu0 %v1243
    %1264 = vmatpush.msra.mxu0 %v1242
    %1265 = vmatpush.msra.mxu0 %v1241
    %1266 = vmatpush.msra.mxu0 %v1240
    %1267 = vmatpush.msra.mxu0 %v1239
    %1268 = vmatpush.msra.mxu0 %v1238
    %1269 = vmatmul.f32.gmra.mxu0 %v1251
    %v1270 = vpop.f32.mrf.mxu0
    %v1271 = vadd.f32 %v1248, %v1270
    %1272 = vdwg.mxu0
    %1273 = vst [vmem:[%s11] sm:$0xff] %v1271
    // Predicated region
    $region58: #{gru_model_forward.1} parent=1 // pred_check
      _
    $region59: #{gru_model_forward.1} parent=1 // pred_check_branch
      %1275 = sbr.rel (0) target = $region61
    $region60: #{gru_model_forward.1} parent=1 // pred_region
      _
    $region61: #{gru_model_forward.1} parent=1 // pred_fallthru
      _
    // Predicated region
    $region62: #{gru_model_forward.1} parent=1 // pred_check
      _
    $region63: #{gru_model_forward.1} parent=1 // pred_check_branch
      %1277 = sbr.rel (0) target = $region65
    $region64: #{gru_model_forward.1} parent=1 // pred_region
      _
    $region65: #{gru_model_forward.1} parent=1 // pred_fallthru
      _
    %1278 = vsyncpa [#allocation3], 1
    %1279 = vsyncpa [#allocation5], 1

</llo_original>
